<compile_context>
chip_gen: v7x
topology: tpu7x:2x2x1
jax: 0.10.0
libtpu: 0.0.40
codegen_flags: <defaults>
</compile_context>

<pallas_src>
import math
from dataclasses import dataclass
from typing import Optional

import jax
import jax.numpy as jnp
from jax.experimental import pallas as pl
from jax.experimental.pallas import tpu as pltpu


@dataclass
class ModelArgs:
    dim: int = 4096
    n_layers: int = 32
    n_heads: int = 32
    n_kv_heads: Optional[int] = None
    vocab_size: int = -1
    multiple_of: int = 226
    ffn_dim_multiplier: Optional[int] = None
    norm_eps: float = 1e-05
    max_batch_size: int = 32
    max_seq_len: int = 2048
    device: str = None


def _hidden_dim(args: ModelArgs) -> int:
    hidden_dim = 4 * args.dim
    hidden_dim = int(2 * hidden_dim / 3)
    if args.ffn_dim_multiplier is not None:
        hidden_dim = int(args.ffn_dim_multiplier * args.dim)
    hidden_dim = args.multiple_of * (
        (hidden_dim + args.multiple_of - 1) // args.multiple_of
    )
    return hidden_dim


def _round_up(x: int, m: int) -> int:
    return (x + m - 1) // m * m


def _ffn_kernel(x_ref, w1_ref, w3_ref, w2_ref, o_ref, acc_ref):
    # x_ref:  (tm, dim)   bf16
    # w1_ref: (dim, th)   bf16   (hidden slice k of w1^T)
    # w3_ref: (dim, th)   bf16   (hidden slice k of w3^T)
    # w2_ref: (th, dim)   bf16   (hidden slice k of w2^T)
    # o_ref:  (tm, dim)   x.dtype
    # acc_ref:(tm, dim)   f32 scratch accumulator (resident across k)
    k = pl.program_id(1)

    @pl.when(k == 0)
    def _init():
        acc_ref[...] = jnp.zeros_like(acc_ref)

    x = x_ref[...]                                                     # bf16
    h1 = jnp.dot(x, w1_ref[...], preferred_element_type=jnp.float32)  # (tm, th)
    v = jnp.dot(x, w3_ref[...], preferred_element_type=jnp.float32)   # (tm, th)
    # SiLU + gate in f32 (sigmoid on EUP co-issues with the MXU work).
    g = (h1 * jax.nn.sigmoid(h1)) * v
    # Cast only at the MXU input for the down projection; accumulate in f32.
    acc_ref[...] += jnp.dot(g.astype(w2_ref.dtype), w2_ref[...],
                            preferred_element_type=jnp.float32)

    @pl.when(k == pl.num_programs(1) - 1)
    def _finalize():
        o_ref[...] = acc_ref[...].astype(o_ref.dtype)


def prepare_ffn_params(w1, w2, w3, dtype=jnp.bfloat16):
    """One-time 'parameter load': PyTorch (out, in) -> (in, out) layout + bf16
    cast.  Do this once per model, never per forward call."""
    return w1.T.astype(dtype), w2.T.astype(dtype), w3.T.astype(dtype)


def feed_forward_pallas(x, w1_io, w2_io, w3_io, *, tm=256, th=512,
                        vmem_limit_bytes=64 * 1024 * 1024):
    """x: (batch, seq, dim). Weights in (in, out) layout (prepare_ffn_params):
    w1_io: (dim, hidden), w2_io: (hidden, dim), w3_io: (dim, hidden)."""
    batch, seq, dim = x.shape
    hidden = w1_io.shape[1]
    if w1_io.shape != (dim, hidden):
        raise ValueError(f"w1_io must be (dim, hidden), got {w1_io.shape}")
    if w3_io.shape != (dim, hidden):
        raise ValueError(
            "w3 is dim->dim in this module; silu(w1(x)) * w3(x) requires "
            f"hidden_dim == dim, got w3_io {w3_io.shape}, hidden={hidden}")
    if w2_io.shape != (hidden, dim):
        raise ValueError(f"w2_io must be (hidden, dim), got {w2_io.shape}")

    M = batch * seq
    tm = min(tm, _round_up(M, 16))       # bf16 packs 16 rows / vreg
    m_pad = _round_up(M, tm)

    # Hidden-dim reduction tile; fall back to a single step (weights fully
    # resident per M tile) when th does not tile `hidden` cleanly.
    if hidden % th != 0 or th % 128 != 0:
        th = hidden
    nk = hidden // th

    compute_dtype = w1_io.dtype
    x2d = x.reshape(M, dim).astype(compute_dtype)
    if m_pad != M:
        x2d = jnp.pad(x2d, ((0, m_pad - M), (0, 0)))   # zero rows are harmless

    flops = 6 * M * dim * hidden + 3 * M * hidden
    bytes_accessed = (x2d.size * x2d.dtype.itemsize
                      + w1_io.size * w1_io.dtype.itemsize
                      + w2_io.size * w2_io.dtype.itemsize
                      + w3_io.size * w3_io.dtype.itemsize
                      + M * dim * x.dtype.itemsize)

    out2d = pl.pallas_call(
        _ffn_kernel,
        out_shape=jax.ShapeDtypeStruct((m_pad, dim), x.dtype),
        grid_spec=pltpu.PrefetchScalarGridSpec(
            num_scalar_prefetch=0,
            grid=(m_pad // tm, nk),                          # reduction axis last
            in_specs=[
                pl.BlockSpec((tm, dim), lambda i, k: (i, 0)),    # x rows
                pl.BlockSpec((dim, th), lambda i, k: (0, k)),    # w1^T hidden slice
                pl.BlockSpec((dim, th), lambda i, k: (0, k)),    # w3^T hidden slice
                pl.BlockSpec((th, dim), lambda i, k: (k, 0)),    # w2^T hidden slice
            ],
            out_specs=pl.BlockSpec((tm, dim), lambda i, k: (i, 0)),
            scratch_shapes=[pltpu.VMEM((tm, dim), jnp.float32)],
        ),
        compiler_params=pltpu.CompilerParams(
            dimension_semantics=("parallel", "arbitrary"),
            vmem_limit_bytes=vmem_limit_bytes,
        ),
        cost_estimate=pl.CostEstimate(
            flops=flops, transcendentals=M * hidden, bytes_accessed=bytes_accessed),
    )(x2d, w1_io, w3_io, w2_io)

    return out2d[:M].reshape(batch, seq, dim)


def feed_forward_ref(x, w1, w2, w3):
    """Pure-JAX f32 reference matching the PyTorch forward (weights (out, in))."""
    h1 = x @ w1.T
    swish = h1 * jax.nn.sigmoid(h1)
    v = x @ w3.T
    return (swish * v) @ w2.T


def feed_forward_ref_matched(x, w1_io, w2_io, w3_io):
    """Reference with the kernel's precision recipe (bf16 MXU inputs, f32 accum)."""
    xb = x.astype(w1_io.dtype)
    h1 = jnp.dot(xb, w1_io, preferred_element_type=jnp.float32)
    v = jnp.dot(xb, w3_io, preferred_element_type=jnp.float32)
    g = (h1 * jax.nn.sigmoid(h1)) * v
    out = jnp.dot(g.astype(w2_io.dtype), w2_io, preferred_element_type=jnp.float32)
    return out.astype(x.dtype)


if __name__ == "__main__":
    # Small lane-aligned config: dim=128 with ffn_dim_multiplier=1 and
    # multiple_of=128, so the module's formula yields hidden_dim == 128 == dim,
    # which the forward's elementwise gate requires (w3 is dim -> dim).
    args = ModelArgs(dim=128, multiple_of=128, ffn_dim_multiplier=1)
    dim = args.dim
    hidden = _hidden_dim(args)
    assert hidden == dim, "forward's silu(w1(x)) * w3(x) requires hidden_dim == dim"

    batch, seq = 2, 200  # M = 400: exercises zero-padding to the 256-row tile
    key = jax.random.PRNGKey(0)
    kx, k1, k2, k3 = jax.random.split(key, 4)

    x = jax.random.normal(kx, (batch, seq, dim), dtype=jnp.float32)
    # PyTorch Linear convention: (out_features, in_features), f32 master weights.
    w1 = jax.random.normal(k1, (hidden, dim), dtype=jnp.float32) / math.sqrt(dim)
    w2 = jax.random.normal(k2, (dim, hidden), dtype=jnp.float32) / math.sqrt(hidden)
    w3 = jax.random.normal(k3, (dim, dim), dtype=jnp.float32) / math.sqrt(dim)

    # One-time parameter preparation (transpose + bf16 cast) -- not per call.
    w1_io, w2_io, w3_io = prepare_ffn_params(w1, w2, w3)

    out = jax.block_until_ready(feed_forward_pallas(x, w1_io, w2_io, w3_io))
    assert out.shape == (batch, seq, dim)
    assert bool(jnp.all(jnp.isfinite(out)))

    # Tight check vs. a precision-matched (bf16-input, f32-accum) reference.
    ref_matched = feed_forward_ref_matched(x, w1_io, w2_io, w3_io)
    assert bool(jnp.allclose(out, ref_matched, atol=2e-2, rtol=2e-2)), \
        "mismatch vs precision-matched reference"

    # Loose, scale-normalized sanity check vs. the pure-f32 PyTorch reference.
    ref_f32 = feed_forward_ref(x, w1, w2, w3)
    err = jnp.max(jnp.abs(out - ref_f32))
    scale = jnp.max(jnp.abs(ref_f32))
    assert bool(err <= 0.05 * scale + 0.05), \
        f"mismatch vs f32 reference: max_err={float(err)} scale={float(scale)}"

    print("KERNEL_OK")
</pallas_src>

<mosaic_0001>
module attributes {stable_mosaic.version = 11 : i64} {
  func.func @_ffn_kernel(%arg0: i32, %arg1: i32, %arg2: memref<256x128xbf16, #tpu.memory_space<vmem>>, %arg3: memref<128x128xbf16, #tpu.memory_space<vmem>>, %arg4: memref<128x128xbf16, #tpu.memory_space<vmem>>, %arg5: memref<128x128xbf16, #tpu.memory_space<vmem>>, %arg6: memref<256x128xf32, #tpu.memory_space<vmem>>, %arg7: memref<256x128xf32, #tpu.memory_space<vmem>>) attributes {dimension_semantics = [#tpu.dimension_semantics<parallel>, #tpu.dimension_semantics<arbitrary>], iteration_bounds = array<i64: 2, 1>, scalar_prefetch = 0 : i64, scratch_operands = 1 : i64, tpu.core_type = #tpu.core_type<tc>, window_params = [{transform_indices = @transform_0, window_bounds = array<i64: 256, 128>}, {transform_indices = @transform_1, window_bounds = array<i64: 128, 128>}, {transform_indices = @transform_2, window_bounds = array<i64: 128, 128>}, {transform_indices = @transform_3, window_bounds = array<i64: 128, 128>}, {transform_indices = @transform_4, window_bounds = array<i64: 256, 128>}]} {
    %c0_i32 = arith.constant 0 : i32
    %0 = arith.cmpi eq, %arg1, %c0_i32 : i32
    %1 = arith.extui %0 : i1 to i32
    %c0_i32_0 = arith.constant 0 : i32
    %2 = arith.cmpi ne, %1, %c0_i32_0 : i32
    scf.if %2 {
      %cst_17 = arith.constant 0.000000e+00 : f32
      %24 = vector.broadcast %cst_17 : f32 to vector<256x128xf32>
      %c0_18 = arith.constant 0 : index
      %c0_19 = arith.constant 0 : index
      %25 = vector.load %arg7[%c0_18, %c0_19] : memref<256x128xf32, #tpu.memory_space<vmem>>, vector<256x128xf32>
      tpu.vector_store %arg7[%c0_18, %c0_19], %24 {strides = array<i32>} : memref<256x128xf32, #tpu.memory_space<vmem>>, vector<256x128xf32>,
    } else {
    }
    %c0 = arith.constant 0 : index
    %c0_1 = arith.constant 0 : index
    %3 = vector.load %arg2[%c0, %c0_1] : memref<256x128xbf16, #tpu.memory_space<vmem>>, vector<256x128xbf16>
    %c0_2 = arith.constant 0 : index
    %c0_3 = arith.constant 0 : index
    %4 = vector.load %arg3[%c0_2, %c0_3] : memref<128x128xbf16, #tpu.memory_space<vmem>>, vector<128x128xbf16>
    %cst = arith.constant dense<0.000000e+00> : vector<256x128xf32>
    %5 = tpu.matmul %3, %4, %cst {dimension_numbers = #tpu.dot_dimension_numbers<[1], [0], [0], [1], [0, 0, 1, 1], [], []>} : vector<256x128xbf16>, vector<128x128xbf16>, vector<256x128xf32> -> vector<256x128xf32>
    %c0_4 = arith.constant 0 : index
    %c0_5 = arith.constant 0 : index
    %6 = vector.load %arg4[%c0_4, %c0_5] : memref<128x128xbf16, #tpu.memory_space<vmem>>, vector<128x128xbf16>
    %cst_6 = arith.constant dense<0.000000e+00> : vector<256x128xf32>
    %7 = tpu.matmul %3, %6, %cst_6 {dimension_numbers = #tpu.dot_dimension_numbers<[1], [0], [0], [1], [0, 0, 1, 1], [], []>} : vector<256x128xbf16>, vector<128x128xbf16>, vector<256x128xf32> -> vector<256x128xf32>
    %8 = arith.negf %5 : vector<256x128xf32>
    %9 = math.exp %8 : vector<256x128xf32>
    %cst_7 = arith.constant 1.000000e+00 : f32
    %10 = vector.broadcast %cst_7 : f32 to vector<256x128xf32>
    %11 = arith.addf %10, %9 : vector<256x128xf32>
    %12 = arith.divf %10, %11 : vector<256x128xf32>
    %13 = arith.mulf %5, %12 : vector<256x128xf32>
    %14 = arith.mulf %13, %7 : vector<256x128xf32>
    %c0_8 = arith.constant 0 : index
    %c0_9 = arith.constant 0 : index
    %15 = vector.load %arg7[%c0_8, %c0_9] : memref<256x128xf32, #tpu.memory_space<vmem>>, vector<256x128xf32>
    %16 = arith.truncf %14 : vector<256x128xf32> to vector<256x128xbf16>
    %c0_10 = arith.constant 0 : index
    %c0_11 = arith.constant 0 : index
    %17 = vector.load %arg5[%c0_10, %c0_11] : memref<128x128xbf16, #tpu.memory_space<vmem>>, vector<128x128xbf16>
    %cst_12 = arith.constant dense<0.000000e+00> : vector<256x128xf32>
    %18 = tpu.matmul %16, %17, %cst_12 {dimension_numbers = #tpu.dot_dimension_numbers<[1], [0], [0], [1], [0, 0, 1, 1], [], []>} : vector<256x128xbf16>, vector<128x128xbf16>, vector<256x128xf32> -> vector<256x128xf32>
    %19 = arith.addf %15, %18 : vector<256x128xf32>
    %c0_13 = arith.constant 0 : index
    %c0_14 = arith.constant 0 : index
    %20 = vector.load %arg7[%c0_13, %c0_14] : memref<256x128xf32, #tpu.memory_space<vmem>>, vector<256x128xf32>
    tpu.vector_store %arg7[%c0_13, %c0_14], %19 {strides = array<i32>} : memref<256x128xf32, #tpu.memory_space<vmem>>, vector<256x128xf32>,
    %c0_i32_15 = arith.constant 0 : i32
    %21 = arith.cmpi eq, %arg1, %c0_i32_15 : i32
    %22 = arith.extui %21 : i1 to i32
    %c0_i32_16 = arith.constant 0 : i32
    %23 = arith.cmpi ne, %22, %c0_i32_16 : i32
    scf.if %23 {
      %c0_17 = arith.constant 0 : index
      %c0_18 = arith.constant 0 : index
      %24 = vector.load %arg7[%c0_17, %c0_18] : memref<256x128xf32, #tpu.memory_space<vmem>>, vector<256x128xf32>
      %c0_19 = arith.constant 0 : index
      %c0_20 = arith.constant 0 : index
      %25 = vector.load %arg6[%c0_19, %c0_20] : memref<256x128xf32, #tpu.memory_space<vmem>>, vector<256x128xf32>
      tpu.vector_store %arg6[%c0_19, %c0_20], %24 {strides = array<i32>} : memref<256x128xf32, #tpu.memory_space<vmem>>, vector<256x128xf32>,
    } else {
    }
    return
  }
  func.func @transform_0(%arg0: i32, %arg1: i32) -> (i32, i32) {
    %c0_i32 = arith.constant 0 : i32
    %c0_i32_0 = arith.constant 0 : i32
    return %arg0, %c0_i32 : i32, i32
  }
  func.func @transform_1(%arg0: i32, %arg1: i32) -> (i32, i32) {
    %c0_i32 = arith.constant 0 : i32
    %c0_i32_0 = arith.constant 0 : i32
    return %c0_i32, %arg1 : i32, i32
  }
  func.func @transform_2(%arg0: i32, %arg1: i32) -> (i32, i32) {
    %c0_i32 = arith.constant 0 : i32
    %c0_i32_0 = arith.constant 0 : i32
    return %c0_i32, %arg1 : i32, i32
  }
  func.func @transform_3(%arg0: i32, %arg1: i32) -> (i32, i32) {
    %c0_i32 = arith.constant 0 : i32
    %c0_i32_0 = arith.constant 0 : i32
    return %arg1, %c0_i32 : i32, i32
  }
  func.func @transform_4(%arg0: i32, %arg1: i32) -> (i32, i32) {
    %c0_i32 = arith.constant 0 : i32
    %c0_i32_0 = arith.constant 0 : i32
    return %arg0, %c0_i32 : i32, i32
  }
}

</mosaic_0001>

<llo_original>
// kernel: tpu_custom_call.1
$region0: #{tpu_custom_call.1}
  #allocation0 [shape = 'u32[]', space=smem, size = 0x4, offset = 0x4, fixed_abs, tag = 'smem constant byte address 0x4 - core index']
  #allocation1 [shape = 'u32[144,128]{1,0:T(1,128)}', space=vmem, size = 0x12000, scoped, tag = 'internal scratch']
  #allocation2 [shape = 'f32[256,128]{1,0:T(8,128)}', space=vmem, size = 0x20000, scoped, tag = 'scratch operand']
  %s0 = inlined_call_operand.hbm [shape: bf16[512,128], index: 0, kind: input, shape index: {}]
  %s1 = inlined_call_operand.hbm [shape: bf16[128,128], index: 1, kind: input, shape index: {}]
  %s2 = inlined_call_operand.hbm [shape: bf16[128,128], index: 2, kind: input, shape index: {}]
  %s3 = inlined_call_operand.hbm [shape: bf16[128,128], index: 3, kind: input, shape index: {}]
  %s4 = inlined_call_operand.hbm [shape: f32[512,128], index: 4, kind: output, shape index: {}]
  %s5 = sld [smem:[#allocation0]]
  $region73: #{tpu_custom_call.1} parent=0
    _
  %s7 = ssub.s32 1, %s5
  %s8 = scalar_select 0, %s7, %s5
  $region1: #{tpu_custom_call.1} parent=0
    #allocation3 [shape = 'u8[131072]{0}', space=vmem, size = 0x20000, scoped, tag = 'input window, operand 0']
    #allocation4 [shape = 's32[2]{0}', space=sflag, size = 0x8, scoped, tag = 'scoped memory for tpu_custom_call.1']
    #allocation5 [shape = 's32[2]{0}', space=sflag, size = 0x8, scoped, tag = 'scoped memory for tpu_custom_call.1']
    #allocation6 [shape = 'u8[32768]{0}', space=vmem, size = 0x8000, scoped, tag = 'input window, operand 1, single buffered']
    #allocation7 [shape = 's32[1]{0}', space=sflag, size = 0x4, scoped, tag = 'scoped memory for tpu_custom_call.1']
    #allocation8 [shape = 'u8[32768]{0}', space=vmem, size = 0x8000, scoped, tag = 'input window, operand 2, single buffered']
    #allocation9 [shape = 'u8[32768]{0}', space=vmem, size = 0x8000, scoped, tag = 'input window, operand 3, single buffered']
    #allocation10 [shape = 's32[1]{0}', space=sflag, size = 0x4, scoped, tag = 'scoped memory for tpu_custom_call.1']
    #allocation11 [shape = 'u8[262144]{0}', space=vmem, size = 0x40000, scoped, tag = 'output window, operand 0']
    %9 = vsyncpa [#allocation4], 0
    %s10 = scalar_lea.sflag [#allocation4], 1
    %11 = vsyncpa %s10, 0
    %12 = vsyncpa [#allocation7], 0
    %13 = vsyncpa [#allocation10], 0
    %14 = vsyncpa [#allocation5], 0
    %s15 = scalar_lea.sflag [#allocation5], 1
    %16 = vsyncpa %s15, 0
    loop: start=0, step=1, limit=4
    $region2: #{tpu_custom_call.1} parent=1 // loop_pre_header
      _
    $region3: #{tpu_custom_call.1} parent=1 // loop_header
      %s18 = sphi 0, %s22
      %p19 = scmp.ge.s32.totalorder %s18, 4
      %s25 = sphi 0, %s37
      %s26 = sphi 0, %s33
      %s27 = sphi 0, %s25
      %s28 = sphi 0, %s26
      %s29 = sphi 0, %s27
      %s30 = sphi 0, %s28
      %s40 = sphi 0, %s42
      %s43 = sphi 0, %s40
      %s44 = sphi 0, %s43
      %s60 = sphi 0, %s44
      %s66 = sphi 0, %s68
      %s69 = sphi 0, %s66
      %s70 = sphi 0, %s69
      %s86 = sphi 0, %s70
      %s92 = sphi 0, %s94
      %s95 = sphi 0, %s92
      %s96 = sphi 0, %s95
      %s112 = sphi 0, %s96
      %s118 = sphi 0, %s120
      %s121 = sphi 0, %s118
      %s122 = sphi 0, %s121
      %s138 = sphi 0, %s122
      %s144 = sphi 0, %s146
      %s147 = sphi 0, %s144
      %s148 = sphi 0, %s147
      %s164 = sphi 0, %s148
    $region4: #{tpu_custom_call.1} parent=1 // loop_header_branch
      %21 = sbr.rel (%p19) target = $region8
    $region5: #{tpu_custom_call.1} parent=1 // loop_body
      %s23 = ssub.s32 %s18, 1
      %s24 = ssub.s32 %s18, 2
      %s31 = sadd.s32 1, %s26
      %p32 = scmp.ge.s32.totalorder %s31, 1
      %s33 = scalar_select %p32, 0, %s31
      %s34 = sadd.s32 1, %s25
      %s35 = scalar_select %p32, %s34, %s25
      %p36 = scmp.ge.s32.totalorder %s35, 2
      %s37 = scalar_select %p36, 0, %s35
      %s38 = ssub.s32 %s25, %s37
      %p39 = scmp.eq.s32.totalorder %s38, 0
      %s41 = sadd.s32 %s40, 1
      %s42 = scalar_select %p39, %s40, %s41
      %p45 = pneg %p39
      %p46 = scmp.eq.s32.totalorder %s18, 1
      %p47 = por %p45, %p46
      %p48 = scmp.ne.s32.totalorder %s40, %s43
      %p49 = scmp.eq.s32.totalorder %s18, 0
      %p50 = por %p48, %p49
      %p51 = scmp.ne.s32.totalorder %s40, %s43
      %p52 = scmp.eq.s32.totalorder %s23, 1
      %p53 = por %p51, %p52
      %p54 = scmp.ne.s32.totalorder %s43, %s44
      %p55 = scmp.eq.s32.totalorder %s23, 0
      %p56 = por %p54, %p55
      %p57 = scmp.ne.s32.totalorder %s43, %s44
      %p58 = scmp.eq.s32.totalorder %s24, 1
      %p59 = por %p57, %p58
      %p61 = scmp.ne.s32.totalorder %s44, %s60
      %p62 = scmp.eq.s32.totalorder %s24, 0
      %p63 = por %p61, %p62
      %s64 = ssub.s32 %s26, %s33
      %p65 = scmp.eq.s32.totalorder %s64, 0
      %s67 = sadd.s32 %s66, 1
      %s68 = scalar_select %p65, %s66, %s67
      %p71 = pneg %p65
      %p72 = scmp.eq.s32.totalorder %s18, 1
      %p73 = por %p71, %p72
      %p74 = scmp.ne.s32.totalorder %s66, %s69
      %p75 = scmp.eq.s32.totalorder %s18, 0
      %p76 = por %p74, %p75
      %p77 = scmp.ne.s32.totalorder %s66, %s69
      %p78 = scmp.eq.s32.totalorder %s23, 1
      %p79 = por %p77, %p78
      %p80 = scmp.ne.s32.totalorder %s69, %s70
      %p81 = scmp.eq.s32.totalorder %s23, 0
      %p82 = por %p80, %p81
      %p83 = scmp.ne.s32.totalorder %s69, %s70
      %p84 = scmp.eq.s32.totalorder %s24, 1
      %p85 = por %p83, %p84
      %p87 = scmp.ne.s32.totalorder %s70, %s86
      %p88 = scmp.eq.s32.totalorder %s24, 0
      %p89 = por %p87, %p88
      %s90 = ssub.s32 %s26, %s33
      %p91 = scmp.eq.s32.totalorder %s90, 0
      %s93 = sadd.s32 %s92, 1
      %s94 = scalar_select %p91, %s92, %s93
      %p97 = pneg %p91
      %p98 = scmp.eq.s32.totalorder %s18, 1
      %p99 = por %p97, %p98
      %p100 = scmp.ne.s32.totalorder %s92, %s95
      %p101 = scmp.eq.s32.totalorder %s18, 0
      %p102 = por %p100, %p101
      %p103 = scmp.ne.s32.totalorder %s92, %s95
      %p104 = scmp.eq.s32.totalorder %s23, 1
      %p105 = por %p103, %p104
      %p106 = scmp.ne.s32.totalorder %s95, %s96
      %p107 = scmp.eq.s32.totalorder %s23, 0
      %p108 = por %p106, %p107
      %p109 = scmp.ne.s32.totalorder %s95, %s96
      %p110 = scmp.eq.s32.totalorder %s24, 1
      %p111 = por %p109, %p110
      %p113 = scmp.ne.s32.totalorder %s96, %s112
      %p114 = scmp.eq.s32.totalorder %s24, 0
      %p115 = por %p113, %p114
      %s116 = ssub.s32 %s26, %s33
      %p117 = scmp.eq.s32.totalorder %s116, 0
      %s119 = sadd.s32 %s118, 1
      %s120 = scalar_select %p117, %s118, %s119
      %p123 = pneg %p117
      %p124 = scmp.eq.s32.totalorder %s18, 1
      %p125 = por %p123, %p124
      %p126 = scmp.ne.s32.totalorder %s118, %s121
      %p127 = scmp.eq.s32.totalorder %s18, 0
      %p128 = por %p126, %p127
      %p129 = scmp.ne.s32.totalorder %s118, %s121
      %p130 = scmp.eq.s32.totalorder %s23, 1
      %p131 = por %p129, %p130
      %p132 = scmp.ne.s32.totalorder %s121, %s122
      %p133 = scmp.eq.s32.totalorder %s23, 0
      %p134 = por %p132, %p133
      %p135 = scmp.ne.s32.totalorder %s121, %s122
      %p136 = scmp.eq.s32.totalorder %s24, 1
      %p137 = por %p135, %p136
      %p139 = scmp.ne.s32.totalorder %s122, %s138
      %p140 = scmp.eq.s32.totalorder %s24, 0
      %p141 = por %p139, %p140
      %s142 = ssub.s32 %s25, %s37
      %p143 = scmp.eq.s32.totalorder %s142, 0
      %s145 = sadd.s32 %s144, 1
      %s146 = scalar_select %p143, %s144, %s145
      %p149 = pneg %p143
      %p150 = scmp.eq.s32.totalorder %s18, 1
      %p151 = por %p149, %p150
      %p152 = scmp.ne.s32.totalorder %s144, %s147
      %p153 = scmp.eq.s32.totalorder %s18, 0
      %p154 = por %p152, %p153
      %p155 = scmp.ne.s32.totalorder %s144, %s147
      %p156 = scmp.eq.s32.totalorder %s23, 1
      %p157 = por %p155, %p156
      %p158 = scmp.ne.s32.totalorder %s147, %s148
      %p159 = scmp.eq.s32.totalorder %s23, 0
      %p160 = por %p158, %p159
      %p161 = scmp.ne.s32.totalorder %s147, %s148
      %p162 = scmp.eq.s32.totalorder %s24, 1
      %p163 = por %p161, %p162
      %p165 = scmp.ne.s32.totalorder %s148, %s164
      %p166 = scmp.eq.s32.totalorder %s24, 0
      %p167 = por %p165, %p166
      %p168 = scmp.le.s32.totalorder 1, %s18
      %p169 = scmp.lt.s32.totalorder %s18, 3
      %p170 = pnand %p168, %p169
      %p171 = pneg %p170
      // Predicated region
      $region9: #{tpu_custom_call.1} parent=5 // pred_check
        _
      $region10: #{tpu_custom_call.1} parent=5 // pred_check_branch
        %173 = sbr.rel (%p170) target = $region12
      $region11: #{tpu_custom_call.1} parent=5 // pred_region
        %s174 = ssub.s32 %s18, 1
        // Predicated region
        $region13: #{tpu_custom_call.1} parent=11 // pred_check
          %p175 = pneg %p82
        $region14: #{tpu_custom_call.1} parent=11 // pred_check_branch
          %177 = sbr.rel (%p175) target = $region16
        $region15: #{tpu_custom_call.1} parent=11 // pred_region
          %s179 = ssub.s32 1024, 1024
          %180 = vsyncadd [#allocation7], %s179
          %s181 = smul.addr %s28, 64
          %s182 = scalar_lea.hbm %s1, %s181
          %s183 = sshll.u32 [#allocation6], 4
          %s184 = int_to_ptr.vmem [resolvable:$true] %s183
          %189 = dma.hbm_to_vmem [thread:$0]  %s182, 1024, %s184, [#allocation7], 64, 64, 4
        $region16: #{tpu_custom_call.1} parent=11 // pred_fallthru
          _
        // Predicated region
        $region17: #{tpu_custom_call.1} parent=11 // pred_check
          %p190 = pneg %p108
        $region18: #{tpu_custom_call.1} parent=11 // pred_check_branch
          %192 = sbr.rel (%p190) target = $region20
        $region19: #{tpu_custom_call.1} parent=11 // pred_region
          %s194 = ssub.s32 1024, 1024
          %195 = vsyncadd [#allocation7], %s194
          %s196 = smul.addr %s28, 64
          %s197 = scalar_lea.hbm %s2, %s196
          %s198 = sshll.u32 [#allocation8], 4
          %s199 = int_to_ptr.vmem [resolvable:$true] %s198
          %204 = dma.hbm_to_vmem [thread:$0]  %s197, 1024, %s199, [#allocation7], 64, 64, 4
        $region20: #{tpu_custom_call.1} parent=11 // pred_fallthru
          _
        // Predicated region
        $region21: #{tpu_custom_call.1} parent=11 // pred_check
          %p205 = pneg %p134
        $region22: #{tpu_custom_call.1} parent=11 // pred_check_branch
          %207 = sbr.rel (%p205) target = $region24
        $region23: #{tpu_custom_call.1} parent=11 // pred_region
          %s208 = smul.u32 16, %s28
          %s210 = ssub.s32 1024, 1024
          %211 = vsyncadd [#allocation10], %s210
          %s212 = smul.addr %s208, 64
          %s213 = scalar_lea.hbm %s3, %s212
          %s214 = sshll.u32 [#allocation9], 4
          %s215 = int_to_ptr.vmem [resolvable:$true] %s214
          %220 = dma.hbm_to_vmem [thread:$0]  %s213, 1024, %s215, [#allocation10], 64, 64, 4
        $region24: #{tpu_custom_call.1} parent=11 // pred_fallthru
          _
      $region12: #{tpu_custom_call.1} parent=5 // pred_fallthru
        _
      %p221 = scmp.lt.s32.totalorder %s18, 2
      // Predicated region
      $region25: #{tpu_custom_call.1} parent=5 // pred_check
        %p222 = pneg %p221
      $region26: #{tpu_custom_call.1} parent=5 // pred_check_branch
        %224 = sbr.rel (%p222) target = $region28
      $region27: #{tpu_custom_call.1} parent=5 // pred_region
        // Predicated region
        $region29: #{tpu_custom_call.1} parent=27 // pred_check
          %p225 = pneg %p50
        $region30: #{tpu_custom_call.1} parent=27 // pred_check_branch
          %227 = sbr.rel (%p225) target = $region32
        $region31: #{tpu_custom_call.1} parent=27 // pred_region
          %s228 = sand.u32 %s40, 1
          %s229 = scalar_lea.sflag [#allocation4], %s228
          %s230 = sand.u32 %s40, 1
          %s231 = smul.addr %s230, 128
          %s232 = scalar_lea.vmem [#allocation3], %s231
          %s233 = smul.u32 32, %s25
          %s235 = ssub.s32 2048, 2048
          %236 = vsyncadd %s229, %s235
          %s237 = smul.addr %s233, 64
          %s238 = scalar_lea.hbm %s0, %s237
          %s239 = sshll.u32 %s232, 4
          %s240 = int_to_ptr.vmem [resolvable:$true] %s239
          %245 = dma.hbm_to_vmem [thread:$0]  %s238, 2048, %s240, %s229, 64, 64, 4
        $region32: #{tpu_custom_call.1} parent=27 // pred_fallthru
          _
      $region28: #{tpu_custom_call.1} parent=5 // pred_fallthru
        _
      %p246 = scmp.le.s32.totalorder 1, %s18
      %p247 = scmp.lt.s32.totalorder %s18, 3
      %p248 = pnand %p246, %p247
      %p249 = pneg %p248
      // Predicated region
      $region33: #{tpu_custom_call.1} parent=5 // pred_check
        _
      $region34: #{tpu_custom_call.1} parent=5 // pred_check_branch
        %251 = sbr.rel (%p248) target = $region36
      $region35: #{tpu_custom_call.1} parent=5 // pred_region
        %s252 = ssub.s32 %s18, 1
        %s253 = sand.u32 %s43, 1
        %s254 = scalar_lea.sflag [#allocation4], %s253
        %s255 = sand.u32 %s43, 1
        %s256 = smul.addr %s255, 128
        %s257 = scalar_lea.vmem [#allocation3], %s256
        // Predicated region
        $region37: #{tpu_custom_call.1} parent=35 // pred_check
          %p258 = pneg %p56
        $region38: #{tpu_custom_call.1} parent=35 // pred_check_branch
          %260 = sbr.rel (%p258) target = $region40
        $region39: #{tpu_custom_call.1} parent=35 // pred_region
          %261 = dma.done %s254, 2048
        $region40: #{tpu_custom_call.1} parent=35 // pred_fallthru
          _
        // Predicated region
        $region41: #{tpu_custom_call.1} parent=35 // pred_check
          %p262 = pneg %p82
        $region42: #{tpu_custom_call.1} parent=35 // pred_check_branch
          %264 = sbr.rel (%p262) target = $region44
        $region43: #{tpu_custom_call.1} parent=35 // pred_region
          %265 = dma.done [#allocation7], 1024
        $region44: #{tpu_custom_call.1} parent=35 // pred_fallthru
          _
        // Predicated region
        $region45: #{tpu_custom_call.1} parent=35 // pred_check
          %p266 = pneg %p108
        $region46: #{tpu_custom_call.1} parent=35 // pred_check_branch
          %268 = sbr.rel (%p266) target = $region48
        $region47: #{tpu_custom_call.1} parent=35 // pred_region
          %269 = dma.done [#allocation7], 1024
        $region48: #{tpu_custom_call.1} parent=35 // pred_fallthru
          _
        // Predicated region
        $region49: #{tpu_custom_call.1} parent=35 // pred_check
          %p270 = pneg %p134
        $region50: #{tpu_custom_call.1} parent=35 // pred_check_branch
          %272 = sbr.rel (%p270) target = $region52
        $region51: #{tpu_custom_call.1} parent=35 // pred_region
          %273 = dma.done [#allocation10], 1024
        $region52: #{tpu_custom_call.1} parent=35 // pred_fallthru
          _
        %s274 = sand.u32 %s43, 1
        %s275 = scalar_lea.sflag [#allocation4], %s274
        %s276 = sand.u32 %s43, 1
        %s277 = smul.addr %s276, 128
        %s278 = scalar_lea.vmem [#allocation3], %s277
        %p279 = pneg %p56
        %p280 = pneg %p53
        %p281 = pneg %p82
        %p282 = pneg %p79
        %p283 = pneg %p108
        %p284 = pneg %p105
        %p285 = pneg %p134
        %p286 = pneg %p131
        %p287 = pneg %p160
        %p288 = pneg %p157
        %s289 = sand.u32 %s147, 1
        %s290 = scalar_lea.sflag [#allocation5], %s289
        %s291 = sand.u32 %s147, 1
        %s292 = smul.addr %s291, 256
        %s293 = scalar_lea.vmem [#allocation11], %s292
        %s294 = smul.u32 32, %s27
        %s295 = smul.u32 16, %s28
        %s296 = smul.u32 32, %s27
        %p298 = scmp.eq.s32.totalorder %s28, 0
        // Predicated region
        $region53: #{tpu_custom_call.1} parent=35 // pred_check
          %p299 = pneg %p298
        $region54: #{tpu_custom_call.1} parent=35 // pred_check_branch
          %301 = sbr.rel (%p299) target = $region56
        $region55: #{tpu_custom_call.1} parent=35 // pred_region
          %302 = vst [vmem:[#allocation2] sm:$0xff] 0.0
          %303 = vst [vmem:[#allocation2 + $0x8] sm:$0xff] 0.0
          %304 = vst [vmem:[#allocation2 + $0x10] sm:$0xff] 0.0
          %305 = vst [vmem:[#allocation2 + $0x18] sm:$0xff] 0.0
          %306 = vst [vmem:[#allocation2 + $0x20] sm:$0xff] 0.0
          %307 = vst [vmem:[#allocation2 + $0x28] sm:$0xff] 0.0
          %308 = vst [vmem:[#allocation2 + $0x30] sm:$0xff] 0.0
          %309 = vst [vmem:[#allocation2 + $0x38] sm:$0xff] 0.0
          %310 = vst [vmem:[#allocation2 + $0x40] sm:$0xff] 0.0
          %311 = vst [vmem:[#allocation2 + $0x48] sm:$0xff] 0.0
          %312 = vst [vmem:[#allocation2 + $0x50] sm:$0xff] 0.0
          %313 = vst [vmem:[#allocation2 + $0x58] sm:$0xff] 0.0
          %314 = vst [vmem:[#allocation2 + $0x60] sm:$0xff] 0.0
          %315 = vst [vmem:[#allocation2 + $0x68] sm:$0xff] 0.0
          %316 = vst [vmem:[#allocation2 + $0x70] sm:$0xff] 0.0
          %317 = vst [vmem:[#allocation2 + $0x78] sm:$0xff] 0.0
          %318 = vst [vmem:[#allocation2 + $0x80] sm:$0xff] 0.0
          %319 = vst [vmem:[#allocation2 + $0x88] sm:$0xff] 0.0
          %320 = vst [vmem:[#allocation2 + $0x90] sm:$0xff] 0.0
          %321 = vst [vmem:[#allocation2 + $0x98] sm:$0xff] 0.0
          %322 = vst [vmem:[#allocation2 + $0xa0] sm:$0xff] 0.0
          %323 = vst [vmem:[#allocation2 + $0xa8] sm:$0xff] 0.0
          %324 = vst [vmem:[#allocation2 + $0xb0] sm:$0xff] 0.0
          %325 = vst [vmem:[#allocation2 + $0xb8] sm:$0xff] 0.0
          %326 = vst [vmem:[#allocation2 + $0xc0] sm:$0xff] 0.0
          %327 = vst [vmem:[#allocation2 + $0xc8] sm:$0xff] 0.0
          %328 = vst [vmem:[#allocation2 + $0xd0] sm:$0xff] 0.0
          %329 = vst [vmem:[#allocation2 + $0xd8] sm:$0xff] 0.0
          %330 = vst [vmem:[#allocation2 + $0xe0] sm:$0xff] 0.0
          %331 = vst [vmem:[#allocation2 + $0xe8] sm:$0xff] 0.0
          %332 = vst [vmem:[#allocation2 + $0xf0] sm:$0xff] 0.0
          %333 = vst [vmem:[#allocation2 + $0xf8] sm:$0xff] 0.0
        $region56: #{tpu_custom_call.1} parent=35 // pred_fallthru
          _
        %v334 = vld [vmem:[%s257] sm:$0xf]
        %v335 = vld [vmem:[%s257 + $0x4] sm:$0xf]
        %v336 = vld [vmem:[%s257 + $0x8] sm:$0xf]
        %v337 = vld [vmem:[%s257 + $0xc] sm:$0xf]
        %v338 = vld [vmem:[%s257 + $0x10] sm:$0xf]
        %v339 = vld [vmem:[%s257 + $0x14] sm:$0xf]
        %v340 = vld [vmem:[%s257 + $0x18] sm:$0xf]
        %v341 = vld [vmem:[%s257 + $0x1c] sm:$0xf]
        %v342 = vld [vmem:[%s257 + $0x20] sm:$0xf]
        %v343 = vld [vmem:[%s257 + $0x24] sm:$0xf]
        %v344 = vld [vmem:[%s257 + $0x28] sm:$0xf]
        %v345 = vld [vmem:[%s257 + $0x2c] sm:$0xf]
        %v346 = vld [vmem:[%s257 + $0x30] sm:$0xf]
        %v347 = vld [vmem:[%s257 + $0x34] sm:$0xf]
        %v348 = vld [vmem:[%s257 + $0x38] sm:$0xf]
        %v349 = vld [vmem:[%s257 + $0x3c] sm:$0xf]
        %v350 = vld [vmem:[%s257 + $0x40] sm:$0xf]
        %v351 = vld [vmem:[%s257 + $0x44] sm:$0xf]
        %v352 = vld [vmem:[%s257 + $0x48] sm:$0xf]
        %v353 = vld [vmem:[%s257 + $0x4c] sm:$0xf]
        %v354 = vld [vmem:[%s257 + $0x50] sm:$0xf]
        %v355 = vld [vmem:[%s257 + $0x54] sm:$0xf]
        %v356 = vld [vmem:[%s257 + $0x58] sm:$0xf]
        %v357 = vld [vmem:[%s257 + $0x5c] sm:$0xf]
        %v358 = vld [vmem:[%s257 + $0x60] sm:$0xf]
        %v359 = vld [vmem:[%s257 + $0x64] sm:$0xf]
        %v360 = vld [vmem:[%s257 + $0x68] sm:$0xf]
        %v361 = vld [vmem:[%s257 + $0x6c] sm:$0xf]
        %v362 = vld [vmem:[%s257 + $0x70] sm:$0xf]
        %v363 = vld [vmem:[%s257 + $0x74] sm:$0xf]
        %v364 = vld [vmem:[%s257 + $0x78] sm:$0xf]
        %v365 = vld [vmem:[%s257 + $0x7c] sm:$0xf]
        %v366 = vld [vmem:[#allocation6] sm:$0xf]
        %v367 = vld [vmem:[#allocation6 + $0x4] sm:$0xf]
        %v368 = vld [vmem:[#allocation6 + $0x8] sm:$0xf]
        %v369 = vld [vmem:[#allocation6 + $0xc] sm:$0xf]
        %v370 = vld [vmem:[#allocation6 + $0x10] sm:$0xf]
        %v371 = vld [vmem:[#allocation6 + $0x14] sm:$0xf]
        %v372 = vld [vmem:[#allocation6 + $0x18] sm:$0xf]
        %v373 = vld [vmem:[#allocation6 + $0x1c] sm:$0xf]
        %v374 = vld [vmem:[#allocation6 + $0x20] sm:$0xf]
        %v375 = vld [vmem:[#allocation6 + $0x24] sm:$0xf]
        %v376 = vld [vmem:[#allocation6 + $0x28] sm:$0xf]
        %v377 = vld [vmem:[#allocation6 + $0x2c] sm:$0xf]
        %v378 = vld [vmem:[#allocation6 + $0x30] sm:$0xf]
        %v379 = vld [vmem:[#allocation6 + $0x34] sm:$0xf]
        %v380 = vld [vmem:[#allocation6 + $0x38] sm:$0xf]
        %v381 = vld [vmem:[#allocation6 + $0x3c] sm:$0xf]
        %v414 = vunpack.c.l.b16 %v334
        %v415 = vunpack.c.l.b16 %v335
        %v416 = vunpack.c.l.b16 %v336
        %v417 = vunpack.c.l.b16 %v337
        %v418 = vunpack.c.l.b16 %v338
        %v419 = vunpack.c.l.b16 %v339
        %v420 = vunpack.c.l.b16 %v340
        %v421 = vunpack.c.l.b16 %v341
        %v422 = vunpack.c.l.b16 %v342
        %v423 = vunpack.c.l.b16 %v343
        %v424 = vunpack.c.l.b16 %v344
        %v425 = vunpack.c.l.b16 %v345
        %v426 = vunpack.c.l.b16 %v346
        %v427 = vunpack.c.l.b16 %v347
        %v428 = vunpack.c.l.b16 %v348
        %v429 = vunpack.c.l.b16 %v349
        %v430 = vunpack.c.l.b16 %v350
        %v431 = vunpack.c.l.b16 %v351
        %v432 = vunpack.c.l.b16 %v352
        %v433 = vunpack.c.l.b16 %v353
        %v434 = vunpack.c.l.b16 %v354
        %v435 = vunpack.c.l.b16 %v355
        %v436 = vunpack.c.l.b16 %v356
        %v437 = vunpack.c.l.b16 %v357
        %v438 = vunpack.c.l.b16 %v358
        %v439 = vunpack.c.l.b16 %v359
        %v440 = vunpack.c.l.b16 %v360
        %v441 = vunpack.c.l.b16 %v361
        %v442 = vunpack.c.l.b16 %v362
        %v443 = vunpack.c.l.b16 %v363
        %v444 = vunpack.c.l.b16 %v364
        %v445 = vunpack.c.l.b16 %v365
        %v446 = vpack.c.b16 %v415, %v414
        %v447 = vpack.c.b16 %v417, %v416
        %v448 = vpack.c.b16 %v419, %v418
        %v449 = vpack.c.b16 %v421, %v420
        %v450 = vpack.c.b16 %v423, %v422
        %v451 = vpack.c.b16 %v425, %v424
        %v452 = vpack.c.b16 %v427, %v426
        %v453 = vpack.c.b16 %v429, %v428
        %v454 = vpack.c.b16 %v431, %v430
        %v455 = vpack.c.b16 %v433, %v432
        %v456 = vpack.c.b16 %v435, %v434
        %v457 = vpack.c.b16 %v437, %v436
        %v458 = vpack.c.b16 %v439, %v438
        %v459 = vpack.c.b16 %v441, %v440
        %v460 = vpack.c.b16 %v443, %v442
        %v461 = vpack.c.b16 %v445, %v444
        %v494 = vunpack.c.l.b16 %v366
        %v495 = vunpack.c.l.b16 %v367
        %v496 = vunpack.c.l.b16 %v368
        %v497 = vunpack.c.l.b16 %v369
        %v498 = vunpack.c.l.b16 %v370
        %v499 = vunpack.c.l.b16 %v371
        %v500 = vunpack.c.l.b16 %v372
        %v501 = vunpack.c.l.b16 %v373
        %v502 = vunpack.c.l.b16 %v374
        %v503 = vunpack.c.l.b16 %v375
        %v504 = vunpack.c.l.b16 %v376
        %v505 = vunpack.c.l.b16 %v377
        %v506 = vunpack.c.l.b16 %v378
        %v507 = vunpack.c.l.b16 %v379
        %v508 = vunpack.c.l.b16 %v380
        %v509 = vunpack.c.l.b16 %v381
        %v510 = vpack.c.b16 %v495, %v494
        %v511 = vpack.c.b16 %v497, %v496
        %v512 = vpack.c.b16 %v499, %v498
        %v513 = vpack.c.b16 %v501, %v500
        %v514 = vpack.c.b16 %v503, %v502
        %v515 = vpack.c.b16 %v505, %v504
        %v516 = vpack.c.b16 %v507, %v506
        %v517 = vpack.c.b16 %v509, %v508
        %526 = vmatprep.subr.bf16.mxu0 0
        %527 = vmatpush1.bf16.msra.mxu0 %v510
        %528 = vmatprep.subr.bf16.mxu0 0
        %529 = vmatpush1.bf16.msra.mxu0 %v511
        %530 = vmatprep.subr.bf16.mxu0 0
        %531 = vmatpush1.bf16.msra.mxu0 %v512
        %532 = vmatprep.subr.bf16.mxu0 0
        %533 = vmatpush1.bf16.msra.mxu0 %v513
        %534 = vmatprep.subr.bf16.mxu0 0
        %535 = vmatpush1.bf16.msra.mxu0 %v514
        %536 = vmatprep.subr.bf16.mxu0 0
        %537 = vmatpush1.bf16.msra.mxu0 %v515
        %538 = vmatprep.subr.bf16.mxu0 0
        %539 = vmatpush1.bf16.msra.mxu0 %v516
        %540 = vmatprep.subr.bf16.mxu0 0
        %541 = vmatpush1.bf16.msra.mxu0 %v517
        %542 = vmatprep.subr.bf16.mxu0 0
        %543 = vmatpush1.bf16.msra.mxu0 0
        %544 = vmatprep.subr.bf16.mxu0 0
        %545 = vmatpush1.bf16.msra.mxu0 0
        %546 = vmatprep.subr.bf16.mxu0 0
        %547 = vmatpush1.bf16.msra.mxu0 0
        %548 = vmatprep.subr.bf16.mxu0 0
        %549 = vmatpush1.bf16.msra.mxu0 0
        %550 = vmatprep.subr.bf16.mxu0 0
        %551 = vmatpush1.bf16.msra.mxu0 0
        %552 = vmatprep.subr.bf16.mxu0 0
        %553 = vmatpush1.bf16.msra.mxu0 0
        %554 = vmatprep.subr.bf16.mxu0 0
        %555 = vmatpush1.bf16.msra.mxu0 0
        %556 = vmatprep.subr.bf16.mxu0 0
        %557 = vmatpush1.bf16.msra.mxu0 0
        %558 = vmatprep.mubr.bf16.mxu0 0
        %559 = vmatmul.mubr.bf16.gmra.mrb[0].mxu0 %v446
        %v560 = vpop.f32.mrb[0].mxu0
        %v561 = vadd.f32 0.0, %v560
        %v562 = vpop.f32.mrb[0].mxu0
        %v563 = vpop.f32.mrb[0].mxu0
        %v564 = vadd.f32 0.0, %v563
        %v565 = vpop.f32.mrb[0].mxu0
        %566 = vmatprep.mubr.bf16.mxu0 0
        %567 = vmatmul.mubr.bf16.gmra.mrb[0].mxu0 %v447
        %v568 = vpop.f32.mrb[0].mxu0
        %v569 = vadd.f32 0.0, %v568
        %v570 = vpop.f32.mrb[0].mxu0
        %v571 = vpop.f32.mrb[0].mxu0
        %v572 = vadd.f32 0.0, %v571
        %v573 = vpop.f32.mrb[0].mxu0
        %574 = vmatprep.mubr.bf16.mxu0 0
        %575 = vmatmul.mubr.bf16.gmra.mrb[0].mxu0 %v448
        %v576 = vpop.f32.mrb[0].mxu0
        %v577 = vadd.f32 0.0, %v576
        %v578 = vpop.f32.mrb[0].mxu0
        %v579 = vpop.f32.mrb[0].mxu0
        %v580 = vadd.f32 0.0, %v579
        %v581 = vpop.f32.mrb[0].mxu0
        %582 = vmatprep.mubr.bf16.mxu0 0
        %583 = vmatmul.mubr.bf16.gmra.mrb[0].mxu0 %v449
        %v584 = vpop.f32.mrb[0].mxu0
        %v585 = vadd.f32 0.0, %v584
        %v586 = vpop.f32.mrb[0].mxu0
        %v587 = vpop.f32.mrb[0].mxu0
        %v588 = vadd.f32 0.0, %v587
        %v589 = vpop.f32.mrb[0].mxu0
        %590 = vmatprep.mubr.bf16.mxu0 0
        %591 = vmatmul.mubr.bf16.gmra.mrb[0].mxu0 %v450
        %v592 = vpop.f32.mrb[0].mxu0
        %v593 = vadd.f32 0.0, %v592
        %v594 = vpop.f32.mrb[0].mxu0
        %v595 = vpop.f32.mrb[0].mxu0
        %v596 = vadd.f32 0.0, %v595
        %v597 = vpop.f32.mrb[0].mxu0
        %598 = vmatprep.mubr.bf16.mxu0 0
        %599 = vmatmul.mubr.bf16.gmra.mrb[0].mxu0 %v451
        %v600 = vpop.f32.mrb[0].mxu0
        %v601 = vadd.f32 0.0, %v600
        %v602 = vpop.f32.mrb[0].mxu0
        %v603 = vpop.f32.mrb[0].mxu0
        %v604 = vadd.f32 0.0, %v603
        %v605 = vpop.f32.mrb[0].mxu0
        %606 = vmatprep.mubr.bf16.mxu0 0
        %607 = vmatmul.mubr.bf16.gmra.mrb[0].mxu0 %v452
        %v608 = vpop.f32.mrb[0].mxu0
        %v609 = vadd.f32 0.0, %v608
        %v610 = vpop.f32.mrb[0].mxu0
        %v611 = vpop.f32.mrb[0].mxu0
        %v612 = vadd.f32 0.0, %v611
        %v613 = vpop.f32.mrb[0].mxu0
        %614 = vmatprep.mubr.bf16.mxu0 0
        %615 = vmatmul.mubr.bf16.gmra.mrb[0].mxu0 %v453
        %v616 = vpop.f32.mrb[0].mxu0
        %v617 = vadd.f32 0.0, %v616
        %v618 = vpop.f32.mrb[0].mxu0
        %v619 = vpop.f32.mrb[0].mxu0
        %v620 = vadd.f32 0.0, %v619
        %v621 = vpop.f32.mrb[0].mxu0
        %622 = vmatprep.mubr.bf16.mxu0 0
        %623 = vmatmul.mubr.bf16.gmra.mrb[0].mxu0 %v454
        %v624 = vpop.f32.mrb[0].mxu0
        %v625 = vadd.f32 0.0, %v624
        %v626 = vpop.f32.mrb[0].mxu0
        %v627 = vpop.f32.mrb[0].mxu0
        %v628 = vadd.f32 0.0, %v627
        %v629 = vpop.f32.mrb[0].mxu0
        %630 = vmatprep.mubr.bf16.mxu0 0
        %631 = vmatmul.mubr.bf16.gmra.mrb[0].mxu0 %v455
        %v632 = vpop.f32.mrb[0].mxu0
        %v633 = vadd.f32 0.0, %v632
        %v634 = vpop.f32.mrb[0].mxu0
        %v635 = vpop.f32.mrb[0].mxu0
        %v636 = vadd.f32 0.0, %v635
        %v637 = vpop.f32.mrb[0].mxu0
        %638 = vmatprep.mubr.bf16.mxu0 0
        %639 = vmatmul.mubr.bf16.gmra.mrb[0].mxu0 %v456
        %v640 = vpop.f32.mrb[0].mxu0
        %v641 = vadd.f32 0.0, %v640
        %v642 = vpop.f32.mrb[0].mxu0
        %v643 = vpop.f32.mrb[0].mxu0
        %v644 = vadd.f32 0.0, %v643
        %v645 = vpop.f32.mrb[0].mxu0
        %646 = vmatprep.mubr.bf16.mxu0 0
        %647 = vmatmul.mubr.bf16.gmra.mrb[0].mxu0 %v457
        %v648 = vpop.f32.mrb[0].mxu0
        %v649 = vadd.f32 0.0, %v648
        %v650 = vpop.f32.mrb[0].mxu0
        %v651 = vpop.f32.mrb[0].mxu0
        %v652 = vadd.f32 0.0, %v651
        %v653 = vpop.f32.mrb[0].mxu0
        %654 = vmatprep.mubr.bf16.mxu0 0
        %655 = vmatmul.mubr.bf16.gmra.mrb[0].mxu0 %v458
        %v656 = vpop.f32.mrb[0].mxu0
        %v657 = vadd.f32 0.0, %v656
        %v658 = vpop.f32.mrb[0].mxu0
        %v659 = vpop.f32.mrb[0].mxu0
        %v660 = vadd.f32 0.0, %v659
        %v661 = vpop.f32.mrb[0].mxu0
        %662 = vmatprep.mubr.bf16.mxu0 0
        %663 = vmatmul.mubr.bf16.gmra.mrb[0].mxu0 %v459
        %v664 = vpop.f32.mrb[0].mxu0
        %v665 = vadd.f32 0.0, %v664
        %v666 = vpop.f32.mrb[0].mxu0
        %v667 = vpop.f32.mrb[0].mxu0
        %v668 = vadd.f32 0.0, %v667
        %v669 = vpop.f32.mrb[0].mxu0
        %670 = vmatprep.mubr.bf16.mxu0 0
        %671 = vmatmul.mubr.bf16.gmra.mrb[0].mxu0 %v460
        %v672 = vpop.f32.mrb[0].mxu0
        %v673 = vadd.f32 0.0, %v672
        %v674 = vpop.f32.mrb[0].mxu0
        %v675 = vpop.f32.mrb[0].mxu0
        %v676 = vadd.f32 0.0, %v675
        %v677 = vpop.f32.mrb[0].mxu0
        %678 = vmatprep.mubr.bf16.mxu0 0
        %679 = vmatmul.mubr.bf16.gmra.mrb[0].mxu0 %v461
        %v680 = vpop.f32.mrb[0].mxu0
        %v681 = vadd.f32 0.0, %v680
        %v682 = vpop.f32.mrb[0].mxu0
        %v683 = vpop.f32.mrb[0].mxu0
        %v684 = vadd.f32 0.0, %v683
        %v685 = vpop.f32.mrb[0].mxu0
        %686 = vdwg.mxu0
        %v687 = vld [vmem:[#allocation8] sm:$0xf]
        %v688 = vld [vmem:[#allocation8 + $0x4] sm:$0xf]
        %v689 = vld [vmem:[#allocation8 + $0x8] sm:$0xf]
        %v690 = vld [vmem:[#allocation8 + $0xc] sm:$0xf]
        %v691 = vld [vmem:[#allocation8 + $0x10] sm:$0xf]
        %v692 = vld [vmem:[#allocation8 + $0x14] sm:$0xf]
        %v693 = vld [vmem:[#allocation8 + $0x18] sm:$0xf]
        %v694 = vld [vmem:[#allocation8 + $0x1c] sm:$0xf]
        %v695 = vld [vmem:[#allocation8 + $0x20] sm:$0xf]
        %v696 = vld [vmem:[#allocation8 + $0x24] sm:$0xf]
        %v697 = vld [vmem:[#allocation8 + $0x28] sm:$0xf]
        %v698 = vld [vmem:[#allocation8 + $0x2c] sm:$0xf]
        %v699 = vld [vmem:[#allocation8 + $0x30] sm:$0xf]
        %v700 = vld [vmem:[#allocation8 + $0x34] sm:$0xf]
        %v701 = vld [vmem:[#allocation8 + $0x38] sm:$0xf]
        %v702 = vld [vmem:[#allocation8 + $0x3c] sm:$0xf]
        %v719 = vunpack.c.l.b16 %v687
        %v720 = vunpack.c.l.b16 %v688
        %v721 = vunpack.c.l.b16 %v689
        %v722 = vunpack.c.l.b16 %v690
        %v723 = vunpack.c.l.b16 %v691
        %v724 = vunpack.c.l.b16 %v692
        %v725 = vunpack.c.l.b16 %v693
        %v726 = vunpack.c.l.b16 %v694
        %v727 = vunpack.c.l.b16 %v695
        %v728 = vunpack.c.l.b16 %v696
        %v729 = vunpack.c.l.b16 %v697
        %v730 = vunpack.c.l.b16 %v698
        %v731 = vunpack.c.l.b16 %v699
        %v732 = vunpack.c.l.b16 %v700
        %v733 = vunpack.c.l.b16 %v701
        %v734 = vunpack.c.l.b16 %v702
        %v735 = vpack.c.b16 %v720, %v719
        %v736 = vpack.c.b16 %v722, %v721
        %v737 = vpack.c.b16 %v724, %v723
        %v738 = vpack.c.b16 %v726, %v725
        %v739 = vpack.c.b16 %v728, %v727
        %v740 = vpack.c.b16 %v730, %v729
        %v741 = vpack.c.b16 %v732, %v731
        %v742 = vpack.c.b16 %v734, %v733
        %751 = vmatprep.subr.bf16.mxu0 0
        %752 = vmatpush1.bf16.msra.mxu0 %v735
        %753 = vmatprep.subr.bf16.mxu0 0
        %754 = vmatpush1.bf16.msra.mxu0 %v736
        %755 = vmatprep.subr.bf16.mxu0 0
        %756 = vmatpush1.bf16.msra.mxu0 %v737
        %757 = vmatprep.subr.bf16.mxu0 0
        %758 = vmatpush1.bf16.msra.mxu0 %v738
        %759 = vmatprep.subr.bf16.mxu0 0
        %760 = vmatpush1.bf16.msra.mxu0 %v739
        %761 = vmatprep.subr.bf16.mxu0 0
        %762 = vmatpush1.bf16.msra.mxu0 %v740
        %763 = vmatprep.subr.bf16.mxu0 0
        %764 = vmatpush1.bf16.msra.mxu0 %v741
        %765 = vmatprep.subr.bf16.mxu0 0
        %766 = vmatpush1.bf16.msra.mxu0 %v742
        %767 = vmatprep.subr.bf16.mxu0 0
        %768 = vmatpush1.bf16.msra.mxu0 0
        %769 = vmatprep.subr.bf16.mxu0 0
        %770 = vmatpush1.bf16.msra.mxu0 0
        %771 = vmatprep.subr.bf16.mxu0 0
        %772 = vmatpush1.bf16.msra.mxu0 0
        %773 = vmatprep.subr.bf16.mxu0 0
        %774 = vmatpush1.bf16.msra.mxu0 0
        %775 = vmatprep.subr.bf16.mxu0 0
        %776 = vmatpush1.bf16.msra.mxu0 0
        %777 = vmatprep.subr.bf16.mxu0 0
        %778 = vmatpush1.bf16.msra.mxu0 0
        %779 = vmatprep.subr.bf16.mxu0 0
        %780 = vmatpush1.bf16.msra.mxu0 0
        %781 = vmatprep.subr.bf16.mxu0 0
        %782 = vmatpush1.bf16.msra.mxu0 0
        %783 = vmatprep.mubr.bf16.mxu0 0
        %784 = vmatmul.mubr.bf16.gmra.mrb[0].mxu0 %v446
        %v785 = vpop.f32.mrb[0].mxu0
        %v786 = vadd.f32 0.0, %v785
        %v787 = vpop.f32.mrb[0].mxu0
        %v788 = vpop.f32.mrb[0].mxu0
        %v789 = vadd.f32 0.0, %v788
        %v790 = vpop.f32.mrb[0].mxu0
        %791 = vmatprep.mubr.bf16.mxu0 0
        %792 = vmatmul.mubr.bf16.gmra.mrb[0].mxu0 %v447
        %v793 = vpop.f32.mrb[0].mxu0
        %v794 = vadd.f32 0.0, %v793
        %v795 = vpop.f32.mrb[0].mxu0
        %v796 = vpop.f32.mrb[0].mxu0
        %v797 = vadd.f32 0.0, %v796
        %v798 = vpop.f32.mrb[0].mxu0
        %799 = vmatprep.mubr.bf16.mxu0 0
        %800 = vmatmul.mubr.bf16.gmra.mrb[0].mxu0 %v448
        %v801 = vpop.f32.mrb[0].mxu0
        %v802 = vadd.f32 0.0, %v801
        %v803 = vpop.f32.mrb[0].mxu0
        %v804 = vpop.f32.mrb[0].mxu0
        %v805 = vadd.f32 0.0, %v804
        %v806 = vpop.f32.mrb[0].mxu0
        %807 = vmatprep.mubr.bf16.mxu0 0
        %808 = vmatmul.mubr.bf16.gmra.mrb[0].mxu0 %v449
        %v809 = vpop.f32.mrb[0].mxu0
        %v810 = vadd.f32 0.0, %v809
        %v811 = vpop.f32.mrb[0].mxu0
        %v812 = vpop.f32.mrb[0].mxu0
        %v813 = vadd.f32 0.0, %v812
        %v814 = vpop.f32.mrb[0].mxu0
        %815 = vmatprep.mubr.bf16.mxu0 0
        %816 = vmatmul.mubr.bf16.gmra.mrb[0].mxu0 %v450
        %v817 = vpop.f32.mrb[0].mxu0
        %v818 = vadd.f32 0.0, %v817
        %v819 = vpop.f32.mrb[0].mxu0
        %v820 = vpop.f32.mrb[0].mxu0
        %v821 = vadd.f32 0.0, %v820
        %v822 = vpop.f32.mrb[0].mxu0
        %823 = vmatprep.mubr.bf16.mxu0 0
        %824 = vmatmul.mubr.bf16.gmra.mrb[0].mxu0 %v451
        %v825 = vpop.f32.mrb[0].mxu0
        %v826 = vadd.f32 0.0, %v825
        %v827 = vpop.f32.mrb[0].mxu0
        %v828 = vpop.f32.mrb[0].mxu0
        %v829 = vadd.f32 0.0, %v828
        %v830 = vpop.f32.mrb[0].mxu0
        %831 = vmatprep.mubr.bf16.mxu0 0
        %832 = vmatmul.mubr.bf16.gmra.mrb[0].mxu0 %v452
        %v833 = vpop.f32.mrb[0].mxu0
        %v834 = vadd.f32 0.0, %v833
        %v835 = vpop.f32.mrb[0].mxu0
        %v836 = vpop.f32.mrb[0].mxu0
        %v837 = vadd.f32 0.0, %v836
        %v838 = vpop.f32.mrb[0].mxu0
        %839 = vmatprep.mubr.bf16.mxu0 0
        %840 = vmatmul.mubr.bf16.gmra.mrb[0].mxu0 %v453
        %v841 = vpop.f32.mrb[0].mxu0
        %v842 = vadd.f32 0.0, %v841
        %v843 = vpop.f32.mrb[0].mxu0
        %v844 = vpop.f32.mrb[0].mxu0
        %v845 = vadd.f32 0.0, %v844
        %v846 = vpop.f32.mrb[0].mxu0
        %847 = vmatprep.mubr.bf16.mxu0 0
        %848 = vmatmul.mubr.bf16.gmra.mrb[0].mxu0 %v454
        %v849 = vpop.f32.mrb[0].mxu0
        %v850 = vadd.f32 0.0, %v849
        %v851 = vpop.f32.mrb[0].mxu0
        %v852 = vpop.f32.mrb[0].mxu0
        %v853 = vadd.f32 0.0, %v852
        %v854 = vpop.f32.mrb[0].mxu0
        %855 = vmatprep.mubr.bf16.mxu0 0
        %856 = vmatmul.mubr.bf16.gmra.mrb[0].mxu0 %v455
        %v857 = vpop.f32.mrb[0].mxu0
        %v858 = vadd.f32 0.0, %v857
        %v859 = vpop.f32.mrb[0].mxu0
        %v860 = vpop.f32.mrb[0].mxu0
        %v861 = vadd.f32 0.0, %v860
        %v862 = vpop.f32.mrb[0].mxu0
        %863 = vmatprep.mubr.bf16.mxu0 0
        %864 = vmatmul.mubr.bf16.gmra.mrb[0].mxu0 %v456
        %v865 = vpop.f32.mrb[0].mxu0
        %v866 = vadd.f32 0.0, %v865
        %v867 = vpop.f32.mrb[0].mxu0
        %v868 = vpop.f32.mrb[0].mxu0
        %v869 = vadd.f32 0.0, %v868
        %v870 = vpop.f32.mrb[0].mxu0
        %871 = vmatprep.mubr.bf16.mxu0 0
        %872 = vmatmul.mubr.bf16.gmra.mrb[0].mxu0 %v457
        %v873 = vpop.f32.mrb[0].mxu0
        %v874 = vadd.f32 0.0, %v873
        %v875 = vpop.f32.mrb[0].mxu0
        %v876 = vpop.f32.mrb[0].mxu0
        %v877 = vadd.f32 0.0, %v876
        %v878 = vpop.f32.mrb[0].mxu0
        %879 = vmatprep.mubr.bf16.mxu0 0
        %880 = vmatmul.mubr.bf16.gmra.mrb[0].mxu0 %v458
        %v881 = vpop.f32.mrb[0].mxu0
        %v882 = vadd.f32 0.0, %v881
        %v883 = vpop.f32.mrb[0].mxu0
        %v884 = vpop.f32.mrb[0].mxu0
        %v885 = vadd.f32 0.0, %v884
        %v886 = vpop.f32.mrb[0].mxu0
        %887 = vmatprep.mubr.bf16.mxu0 0
        %888 = vmatmul.mubr.bf16.gmra.mrb[0].mxu0 %v459
        %v889 = vpop.f32.mrb[0].mxu0
        %v890 = vadd.f32 0.0, %v889
        %v891 = vpop.f32.mrb[0].mxu0
        %v892 = vpop.f32.mrb[0].mxu0
        %v893 = vadd.f32 0.0, %v892
        %v894 = vpop.f32.mrb[0].mxu0
        %895 = vmatprep.mubr.bf16.mxu0 0
        %896 = vmatmul.mubr.bf16.gmra.mrb[0].mxu0 %v460
        %v897 = vpop.f32.mrb[0].mxu0
        %v898 = vadd.f32 0.0, %v897
        %v899 = vpop.f32.mrb[0].mxu0
        %v900 = vpop.f32.mrb[0].mxu0
        %v901 = vadd.f32 0.0, %v900
        %v902 = vpop.f32.mrb[0].mxu0
        %903 = vmatprep.mubr.bf16.mxu0 0
        %904 = vmatmul.mubr.bf16.gmra.mrb[0].mxu0 %v461
        %v905 = vpop.f32.mrb[0].mxu0
        %v906 = vadd.f32 0.0, %v905
        %v907 = vpop.f32.mrb[0].mxu0
        %v908 = vpop.f32.mrb[0].mxu0
        %v909 = vadd.f32 0.0, %v908
        %v910 = vpop.f32.mrb[0].mxu0
        %911 = vdwg.mxu0
        %v912 = vxor.u32 %v561, 2147483648
        %v913 = vxor.u32 %v564, 2147483648
        %v914 = vxor.u32 %v569, 2147483648
        %v915 = vxor.u32 %v572, 2147483648
        %v916 = vxor.u32 %v577, 2147483648
        %v917 = vxor.u32 %v580, 2147483648
        %v918 = vxor.u32 %v585, 2147483648
        %v919 = vxor.u32 %v588, 2147483648
        %v920 = vxor.u32 %v593, 2147483648
        %v921 = vxor.u32 %v596, 2147483648
        %v922 = vxor.u32 %v601, 2147483648
        %v923 = vxor.u32 %v604, 2147483648
        %v924 = vxor.u32 %v609, 2147483648
        %v925 = vxor.u32 %v612, 2147483648
        %v926 = vxor.u32 %v617, 2147483648
        %v927 = vxor.u32 %v620, 2147483648
        %v928 = vxor.u32 %v625, 2147483648
        %v929 = vxor.u32 %v628, 2147483648
        %v930 = vxor.u32 %v633, 2147483648
        %v931 = vxor.u32 %v636, 2147483648
        %v932 = vxor.u32 %v641, 2147483648
        %v933 = vxor.u32 %v644, 2147483648
        %v934 = vxor.u32 %v649, 2147483648
        %v935 = vxor.u32 %v652, 2147483648
        %v936 = vxor.u32 %v657, 2147483648
        %v937 = vxor.u32 %v660, 2147483648
        %v938 = vxor.u32 %v665, 2147483648
        %v939 = vxor.u32 %v668, 2147483648
        %v940 = vxor.u32 %v673, 2147483648
        %v941 = vxor.u32 %v676, 2147483648
        %v942 = vxor.u32 %v681, 2147483648
        %v943 = vxor.u32 %v684, 2147483648
        %v944 = vmul.f32 %v912, 1.442695
        %v945 = vpow.pop %v944
        %v946 = vmul.f32 %v913, 1.442695
        %v947 = vpow.pop %v946
        %v948 = vmul.f32 %v914, 1.442695
        %v949 = vpow.pop %v948
        %v950 = vmul.f32 %v915, 1.442695
        %v951 = vpow.pop %v950
        %v952 = vmul.f32 %v916, 1.442695
        %v953 = vpow.pop %v952
        %v954 = vmul.f32 %v917, 1.442695
        %v955 = vpow.pop %v954
        %v956 = vmul.f32 %v918, 1.442695
        %v957 = vpow.pop %v956
        %v958 = vmul.f32 %v919, 1.442695
        %v959 = vpow.pop %v958
        %v960 = vmul.f32 %v920, 1.442695
        %v961 = vpow.pop %v960
        %v962 = vmul.f32 %v921, 1.442695
        %v963 = vpow.pop %v962
        %v964 = vmul.f32 %v922, 1.442695
        %v965 = vpow.pop %v964
        %v966 = vmul.f32 %v923, 1.442695
        %v967 = vpow.pop %v966
        %v968 = vmul.f32 %v924, 1.442695
        %v969 = vpow.pop %v968
        %v970 = vmul.f32 %v925, 1.442695
        %v971 = vpow.pop %v970
        %v972 = vmul.f32 %v926, 1.442695
        %v973 = vpow.pop %v972
        %v974 = vmul.f32 %v927, 1.442695
        %v975 = vpow.pop %v974
        %v976 = vmul.f32 %v928, 1.442695
        %v977 = vpow.pop %v976
        %v978 = vmul.f32 %v929, 1.442695
        %v979 = vpow.pop %v978
        %v980 = vmul.f32 %v930, 1.442695
        %v981 = vpow.pop %v980
        %v982 = vmul.f32 %v931, 1.442695
        %v983 = vpow.pop %v982
        %v984 = vmul.f32 %v932, 1.442695
        %v985 = vpow.pop %v984
        %v986 = vmul.f32 %v933, 1.442695
        %v987 = vpow.pop %v986
        %v988 = vmul.f32 %v934, 1.442695
        %v989 = vpow.pop %v988
        %v990 = vmul.f32 %v935, 1.442695
        %v991 = vpow.pop %v990
        %v992 = vmul.f32 %v936, 1.442695
        %v993 = vpow.pop %v992
        %v994 = vmul.f32 %v937, 1.442695
        %v995 = vpow.pop %v994
        %v996 = vmul.f32 %v938, 1.442695
        %v997 = vpow.pop %v996
        %v998 = vmul.f32 %v939, 1.442695
        %v999 = vpow.pop %v998
        %v1000 = vmul.f32 %v940, 1.442695
        %v1001 = vpow.pop %v1000
        %v1002 = vmul.f32 %v941, 1.442695
        %v1003 = vpow.pop %v1002
        %v1004 = vmul.f32 %v942, 1.442695
        %v1005 = vpow.pop %v1004
        %v1006 = vmul.f32 %v943, 1.442695
        %v1007 = vpow.pop %v1006
        %v1008 = vadd.f32 %v945, 1.0
        %v1009 = vadd.f32 %v947, 1.0
        %v1010 = vadd.f32 %v949, 1.0
        %v1011 = vadd.f32 %v951, 1.0
        %v1012 = vadd.f32 %v953, 1.0
        %v1013 = vadd.f32 %v955, 1.0
        %v1014 = vadd.f32 %v957, 1.0
        %v1015 = vadd.f32 %v959, 1.0
        %v1016 = vadd.f32 %v961, 1.0
        %v1017 = vadd.f32 %v963, 1.0
        %v1018 = vadd.f32 %v965, 1.0
        %v1019 = vadd.f32 %v967, 1.0
        %v1020 = vadd.f32 %v969, 1.0
        %v1021 = vadd.f32 %v971, 1.0
        %v1022 = vadd.f32 %v973, 1.0
        %v1023 = vadd.f32 %v975, 1.0
        %v1024 = vadd.f32 %v977, 1.0
        %v1025 = vadd.f32 %v979, 1.0
        %v1026 = vadd.f32 %v981, 1.0
        %v1027 = vadd.f32 %v983, 1.0
        %v1028 = vadd.f32 %v985, 1.0
        %v1029 = vadd.f32 %v987, 1.0
        %v1030 = vadd.f32 %v989, 1.0
        %v1031 = vadd.f32 %v991, 1.0
        %v1032 = vadd.f32 %v993, 1.0
        %v1033 = vadd.f32 %v995, 1.0
        %v1034 = vadd.f32 %v997, 1.0
        %v1035 = vadd.f32 %v999, 1.0
        %v1036 = vadd.f32 %v1001, 1.0
        %v1037 = vadd.f32 %v1003, 1.0
        %v1038 = vadd.f32 %v1005, 1.0
        %v1039 = vadd.f32 %v1007, 1.0
        %v1040 = vrcp.pop %v1008
        %v1041 = vmul.f32 1.0, %v1040
        %v1042 = vrcp.pop %v1009
        %v1043 = vmul.f32 1.0, %v1042
        %v1044 = vrcp.pop %v1010
        %v1045 = vmul.f32 1.0, %v1044
        %v1046 = vrcp.pop %v1011
        %v1047 = vmul.f32 1.0, %v1046
        %v1048 = vrcp.pop %v1012
        %v1049 = vmul.f32 1.0, %v1048
        %v1050 = vrcp.pop %v1013
        %v1051 = vmul.f32 1.0, %v1050
        %v1052 = vrcp.pop %v1014
        %v1053 = vmul.f32 1.0, %v1052
        %v1054 = vrcp.pop %v1015
        %v1055 = vmul.f32 1.0, %v1054
        %v1056 = vrcp.pop %v1016
        %v1057 = vmul.f32 1.0, %v1056
        %v1058 = vrcp.pop %v1017
        %v1059 = vmul.f32 1.0, %v1058
        %v1060 = vrcp.pop %v1018
        %v1061 = vmul.f32 1.0, %v1060
        %v1062 = vrcp.pop %v1019
        %v1063 = vmul.f32 1.0, %v1062
        %v1064 = vrcp.pop %v1020
        %v1065 = vmul.f32 1.0, %v1064
        %v1066 = vrcp.pop %v1021
        %v1067 = vmul.f32 1.0, %v1066
        %v1068 = vrcp.pop %v1022
        %v1069 = vmul.f32 1.0, %v1068
        %v1070 = vrcp.pop %v1023
        %v1071 = vmul.f32 1.0, %v1070
        %v1072 = vrcp.pop %v1024
        %v1073 = vmul.f32 1.0, %v1072
        %v1074 = vrcp.pop %v1025
        %v1075 = vmul.f32 1.0, %v1074
        %v1076 = vrcp.pop %v1026
        %v1077 = vmul.f32 1.0, %v1076
        %v1078 = vrcp.pop %v1027
        %v1079 = vmul.f32 1.0, %v1078
        %v1080 = vrcp.pop %v1028
        %v1081 = vmul.f32 1.0, %v1080
        %v1082 = vrcp.pop %v1029
        %v1083 = vmul.f32 1.0, %v1082
        %v1084 = vrcp.pop %v1030
        %v1085 = vmul.f32 1.0, %v1084
        %v1086 = vrcp.pop %v1031
        %v1087 = vmul.f32 1.0, %v1086
        %v1088 = vrcp.pop %v1032
        %v1089 = vmul.f32 1.0, %v1088
        %v1090 = vrcp.pop %v1033
        %v1091 = vmul.f32 1.0, %v1090
        %v1092 = vrcp.pop %v1034
        %v1093 = vmul.f32 1.0, %v1092
        %v1094 = vrcp.pop %v1035
        %v1095 = vmul.f32 1.0, %v1094
        %v1096 = vrcp.pop %v1036
        %v1097 = vmul.f32 1.0, %v1096
        %v1098 = vrcp.pop %v1037
        %v1099 = vmul.f32 1.0, %v1098
        %v1100 = vrcp.pop %v1038
        %v1101 = vmul.f32 1.0, %v1100
        %v1102 = vrcp.pop %v1039
        %v1103 = vmul.f32 1.0, %v1102
        %v1104 = vmul.f32 %v561, %v1041
        %v1105 = vmul.f32 %v564, %v1043
        %v1106 = vmul.f32 %v569, %v1045
        %v1107 = vmul.f32 %v572, %v1047
        %v1108 = vmul.f32 %v577, %v1049
        %v1109 = vmul.f32 %v580, %v1051
        %v1110 = vmul.f32 %v585, %v1053
        %v1111 = vmul.f32 %v588, %v1055
        %v1112 = vmul.f32 %v593, %v1057
        %v1113 = vmul.f32 %v596, %v1059
        %v1114 = vmul.f32 %v601, %v1061
        %v1115 = vmul.f32 %v604, %v1063
        %v1116 = vmul.f32 %v609, %v1065
        %v1117 = vmul.f32 %v612, %v1067
        %v1118 = vmul.f32 %v617, %v1069
        %v1119 = vmul.f32 %v620, %v1071
        %v1120 = vmul.f32 %v625, %v1073
        %v1121 = vmul.f32 %v628, %v1075
        %v1122 = vmul.f32 %v633, %v1077
        %v1123 = vmul.f32 %v636, %v1079
        %v1124 = vmul.f32 %v641, %v1081
        %v1125 = vmul.f32 %v644, %v1083
        %v1126 = vmul.f32 %v649, %v1085
        %v1127 = vmul.f32 %v652, %v1087
        %v1128 = vmul.f32 %v657, %v1089
        %v1129 = vmul.f32 %v660, %v1091
        %v1130 = vmul.f32 %v665, %v1093
        %v1131 = vmul.f32 %v668, %v1095
        %v1132 = vmul.f32 %v673, %v1097
        %v1133 = vmul.f32 %v676, %v1099
        %v1134 = vmul.f32 %v681, %v1101
        %v1135 = vmul.f32 %v684, %v1103
        %v1136 = vmul.f32 %v1104, %v786
        %v1137 = vmul.f32 %v1105, %v789
        %v1138 = vmul.f32 %v1106, %v794
        %v1139 = vmul.f32 %v1107, %v797
        %v1140 = vmul.f32 %v1108, %v802
        %v1141 = vmul.f32 %v1109, %v805
        %v1142 = vmul.f32 %v1110, %v810
        %v1143 = vmul.f32 %v1111, %v813
        %v1144 = vmul.f32 %v1112, %v818
        %v1145 = vmul.f32 %v1113, %v821
        %v1146 = vmul.f32 %v1114, %v826
        %v1147 = vmul.f32 %v1115, %v829
        %v1148 = vmul.f32 %v1116, %v834
        %v1149 = vmul.f32 %v1117, %v837
        %v1150 = vmul.f32 %v1118, %v842
        %v1151 = vmul.f32 %v1119, %v845
        %v1152 = vmul.f32 %v1120, %v850
        %v1153 = vmul.f32 %v1121, %v853
        %v1154 = vmul.f32 %v1122, %v858
        %v1155 = vmul.f32 %v1123, %v861
        %v1156 = vmul.f32 %v1124, %v866
        %v1157 = vmul.f32 %v1125, %v869
        %v1158 = vmul.f32 %v1126, %v874
        %v1159 = vmul.f32 %v1127, %v877
        %v1160 = vmul.f32 %v1128, %v882
        %v1161 = vmul.f32 %v1129, %v885
        %v1162 = vmul.f32 %v1130, %v890
        %v1163 = vmul.f32 %v1131, %v893
        %v1164 = vmul.f32 %v1132, %v898
        %v1165 = vmul.f32 %v1133, %v901
        %v1166 = vmul.f32 %v1134, %v906
        %v1167 = vmul.f32 %v1135, %v909
        %v1168 = vld [vmem:[#allocation2] sm:$0xff]
        %v1169 = vld [vmem:[#allocation2 + $0x8] sm:$0xff]
        %v1170 = vld [vmem:[#allocation2 + $0x10] sm:$0xff]
        %v1171 = vld [vmem:[#allocation2 + $0x18] sm:$0xff]
        %v1172 = vld [vmem:[#allocation2 + $0x20] sm:$0xff]
        %v1173 = vld [vmem:[#allocation2 + $0x28] sm:$0xff]
        %v1174 = vld [vmem:[#allocation2 + $0x30] sm:$0xff]
        %v1175 = vld [vmem:[#allocation2 + $0x38] sm:$0xff]
        %v1176 = vld [vmem:[#allocation2 + $0x40] sm:$0xff]
        %v1177 = vld [vmem:[#allocation2 + $0x48] sm:$0xff]
        %v1178 = vld [vmem:[#allocation2 + $0x50] sm:$0xff]
        %v1179 = vld [vmem:[#allocation2 + $0x58] sm:$0xff]
        %v1180 = vld [vmem:[#allocation2 + $0x60] sm:$0xff]
        %v1181 = vld [vmem:[#allocation2 + $0x68] sm:$0xff]
        %v1182 = vld [vmem:[#allocation2 + $0x70] sm:$0xff]
        %v1183 = vld [vmem:[#allocation2 + $0x78] sm:$0xff]
        %v1184 = vld [vmem:[#allocation2 + $0x80] sm:$0xff]
        %v1185 = vld [vmem:[#allocation2 + $0x88] sm:$0xff]
        %v1186 = vld [vmem:[#allocation2 + $0x90] sm:$0xff]
        %v1187 = vld [vmem:[#allocation2 + $0x98] sm:$0xff]
        %v1188 = vld [vmem:[#allocation2 + $0xa0] sm:$0xff]
        %v1189 = vld [vmem:[#allocation2 + $0xa8] sm:$0xff]
        %v1190 = vld [vmem:[#allocation2 + $0xb0] sm:$0xff]
        %v1191 = vld [vmem:[#allocation2 + $0xb8] sm:$0xff]
        %v1192 = vld [vmem:[#allocation2 + $0xc0] sm:$0xff]
        %v1193 = vld [vmem:[#allocation2 + $0xc8] sm:$0xff]
        %v1194 = vld [vmem:[#allocation2 + $0xd0] sm:$0xff]
        %v1195 = vld [vmem:[#allocation2 + $0xd8] sm:$0xff]
        %v1196 = vld [vmem:[#allocation2 + $0xe0] sm:$0xff]
        %v1197 = vld [vmem:[#allocation2 + $0xe8] sm:$0xff]
        %v1198 = vld [vmem:[#allocation2 + $0xf0] sm:$0xff]
        %v1199 = vld [vmem:[#allocation2 + $0xf8] sm:$0xff]
        %v1200 = vpack.c.bf16 %v1137, %v1136
        %v1201 = vpack.c.bf16 %v1139, %v1138
        %v1202 = vpack.c.bf16 %v1141, %v1140
        %v1203 = vpack.c.bf16 %v1143, %v1142
        %v1204 = vpack.c.bf16 %v1145, %v1144
        %v1205 = vpack.c.bf16 %v1147, %v1146
        %v1206 = vpack.c.bf16 %v1149, %v1148
        %v1207 = vpack.c.bf16 %v1151, %v1150
        %v1208 = vpack.c.bf16 %v1153, %v1152
        %v1209 = vpack.c.bf16 %v1155, %v1154
        %v1210 = vpack.c.bf16 %v1157, %v1156
        %v1211 = vpack.c.bf16 %v1159, %v1158
        %v1212 = vpack.c.bf16 %v1161, %v1160
        %v1213 = vpack.c.bf16 %v1163, %v1162
        %v1214 = vpack.c.bf16 %v1165, %v1164
        %v1215 = vpack.c.bf16 %v1167, %v1166
        %v1216 = vld [vmem:[#allocation9] sm:$0xf]
        %v1217 = vld [vmem:[#allocation9 + $0x4] sm:$0xf]
        %v1218 = vld [vmem:[#allocation9 + $0x8] sm:$0xf]
        %v1219 = vld [vmem:[#allocation9 + $0xc] sm:$0xf]
        %v1220 = vld [vmem:[#allocation9 + $0x10] sm:$0xf]
        %v1221 = vld [vmem:[#allocation9 + $0x14] sm:$0xf]
        %v1222 = vld [vmem:[#allocation9 + $0x18] sm:$0xf]
        %v1223 = vld [vmem:[#allocation9 + $0x1c] sm:$0xf]
        %v1224 = vld [vmem:[#allocation9 + $0x20] sm:$0xf]
        %v1225 = vld [vmem:[#allocation9 + $0x24] sm:$0xf]
        %v1226 = vld [vmem:[#allocation9 + $0x28] sm:$0xf]
        %v1227 = vld [vmem:[#allocation9 + $0x2c] sm:$0xf]
        %v1228 = vld [vmem:[#allocation9 + $0x30] sm:$0xf]
        %v1229 = vld [vmem:[#allocation9 + $0x34] sm:$0xf]
        %v1230 = vld [vmem:[#allocation9 + $0x38] sm:$0xf]
        %v1231 = vld [vmem:[#allocation9 + $0x3c] sm:$0xf]
        %v1248 = vunpack.c.l.b16 %v1216
        %v1249 = vunpack.c.l.b16 %v1217
        %v1250 = vunpack.c.l.b16 %v1218
        %v1251 = vunpack.c.l.b16 %v1219
        %v1252 = vunpack.c.l.b16 %v1220
        %v1253 = vunpack.c.l.b16 %v1221
        %v1254 = vunpack.c.l.b16 %v1222
        %v1255 = vunpack.c.l.b16 %v1223
        %v1256 = vunpack.c.l.b16 %v1224
        %v1257 = vunpack.c.l.b16 %v1225
        %v1258 = vunpack.c.l.b16 %v1226
        %v1259 = vunpack.c.l.b16 %v1227
        %v1260 = vunpack.c.l.b16 %v1228
        %v1261 = vunpack.c.l.b16 %v1229
        %v1262 = vunpack.c.l.b16 %v1230
        %v1263 = vunpack.c.l.b16 %v1231
        %v1264 = vpack.c.b16 %v1249, %v1248
        %v1265 = vpack.c.b16 %v1251, %v1250
        %v1266 = vpack.c.b16 %v1253, %v1252
        %v1267 = vpack.c.b16 %v1255, %v1254
        %v1268 = vpack.c.b16 %v1257, %v1256
        %v1269 = vpack.c.b16 %v1259, %v1258
        %v1270 = vpack.c.b16 %v1261, %v1260
        %v1271 = vpack.c.b16 %v1263, %v1262
        %1280 = vmatprep.subr.bf16.mxu0 0
        %1281 = vmatpush1.bf16.msra.mxu0 %v1264
        %1282 = vmatprep.subr.bf16.mxu0 0
        %1283 = vmatpush1.bf16.msra.mxu0 %v1265
        %1284 = vmatprep.subr.bf16.mxu0 0
        %1285 = vmatpush1.bf16.msra.mxu0 %v1266
        %1286 = vmatprep.subr.bf16.mxu0 0
        %1287 = vmatpush1.bf16.msra.mxu0 %v1267
        %1288 = vmatprep.subr.bf16.mxu0 0
        %1289 = vmatpush1.bf16.msra.mxu0 %v1268
        %1290 = vmatprep.subr.bf16.mxu0 0
        %1291 = vmatpush1.bf16.msra.mxu0 %v1269
        %1292 = vmatprep.subr.bf16.mxu0 0
        %1293 = vmatpush1.bf16.msra.mxu0 %v1270
        %1294 = vmatprep.subr.bf16.mxu0 0
        %1295 = vmatpush1.bf16.msra.mxu0 %v1271
        %1296 = vmatprep.subr.bf16.mxu0 0
        %1297 = vmatpush1.bf16.msra.mxu0 0
        %1298 = vmatprep.subr.bf16.mxu0 0
        %1299 = vmatpush1.bf16.msra.mxu0 0
        %1300 = vmatprep.subr.bf16.mxu0 0
        %1301 = vmatpush1.bf16.msra.mxu0 0
        %1302 = vmatprep.subr.bf16.mxu0 0
        %1303 = vmatpush1.bf16.msra.mxu0 0
        %1304 = vmatprep.subr.bf16.mxu0 0
        %1305 = vmatpush1.bf16.msra.mxu0 0
        %1306 = vmatprep.subr.bf16.mxu0 0
        %1307 = vmatpush1.bf16.msra.mxu0 0
        %1308 = vmatprep.subr.bf16.mxu0 0
        %1309 = vmatpush1.bf16.msra.mxu0 0
        %1310 = vmatprep.subr.bf16.mxu0 0
        %1311 = vmatpush1.bf16.msra.mxu0 0
        %1312 = vmatprep.mubr.bf16.mxu0 0
        %1313 = vmatmul.mubr.bf16.gmra.mrb[0].mxu0 %v1200
        %v1314 = vpop.f32.mrb[0].mxu0
        %v1315 = vadd.f32 0.0, %v1314
        %v1316 = vpop.f32.mrb[0].mxu0
        %v1317 = vpop.f32.mrb[0].mxu0
        %v1318 = vadd.f32 0.0, %v1317
        %v1319 = vpop.f32.mrb[0].mxu0
        %1320 = vmatprep.mubr.bf16.mxu0 0
        %1321 = vmatmul.mubr.bf16.gmra.mrb[0].mxu0 %v1201
        %v1322 = vpop.f32.mrb[0].mxu0
        %v1323 = vadd.f32 0.0, %v1322
        %v1324 = vpop.f32.mrb[0].mxu0
        %v1325 = vpop.f32.mrb[0].mxu0
        %v1326 = vadd.f32 0.0, %v1325
        %v1327 = vpop.f32.mrb[0].mxu0
        %1328 = vmatprep.mubr.bf16.mxu0 0
        %1329 = vmatmul.mubr.bf16.gmra.mrb[0].mxu0 %v1202
        %v1330 = vpop.f32.mrb[0].mxu0
        %v1331 = vadd.f32 0.0, %v1330
        %v1332 = vpop.f32.mrb[0].mxu0
        %v1333 = vpop.f32.mrb[0].mxu0
        %v1334 = vadd.f32 0.0, %v1333
        %v1335 = vpop.f32.mrb[0].mxu0
        %1336 = vmatprep.mubr.bf16.mxu0 0
        %1337 = vmatmul.mubr.bf16.gmra.mrb[0].mxu0 %v1203
        %v1338 = vpop.f32.mrb[0].mxu0
        %v1339 = vadd.f32 0.0, %v1338
        %v1340 = vpop.f32.mrb[0].mxu0
        %v1341 = vpop.f32.mrb[0].mxu0
        %v1342 = vadd.f32 0.0, %v1341
        %v1343 = vpop.f32.mrb[0].mxu0
        %1344 = vmatprep.mubr.bf16.mxu0 0
        %1345 = vmatmul.mubr.bf16.gmra.mrb[0].mxu0 %v1204
        %v1346 = vpop.f32.mrb[0].mxu0
        %v1347 = vadd.f32 0.0, %v1346
        %v1348 = vpop.f32.mrb[0].mxu0
        %v1349 = vpop.f32.mrb[0].mxu0
        %v1350 = vadd.f32 0.0, %v1349
        %v1351 = vpop.f32.mrb[0].mxu0
        %1352 = vmatprep.mubr.bf16.mxu0 0
        %1353 = vmatmul.mubr.bf16.gmra.mrb[0].mxu0 %v1205
        %v1354 = vpop.f32.mrb[0].mxu0
        %v1355 = vadd.f32 0.0, %v1354
        %v1356 = vpop.f32.mrb[0].mxu0
        %v1357 = vpop.f32.mrb[0].mxu0
        %v1358 = vadd.f32 0.0, %v1357
        %v1359 = vpop.f32.mrb[0].mxu0
        %1360 = vmatprep.mubr.bf16.mxu0 0
        %1361 = vmatmul.mubr.bf16.gmra.mrb[0].mxu0 %v1206
        %v1362 = vpop.f32.mrb[0].mxu0
        %v1363 = vadd.f32 0.0, %v1362
        %v1364 = vpop.f32.mrb[0].mxu0
        %v1365 = vpop.f32.mrb[0].mxu0
        %v1366 = vadd.f32 0.0, %v1365
        %v1367 = vpop.f32.mrb[0].mxu0
        %1368 = vmatprep.mubr.bf16.mxu0 0
        %1369 = vmatmul.mubr.bf16.gmra.mrb[0].mxu0 %v1207
        %v1370 = vpop.f32.mrb[0].mxu0
        %v1371 = vadd.f32 0.0, %v1370
        %v1372 = vpop.f32.mrb[0].mxu0
        %v1373 = vpop.f32.mrb[0].mxu0
        %v1374 = vadd.f32 0.0, %v1373
        %v1375 = vpop.f32.mrb[0].mxu0
        %1376 = vmatprep.mubr.bf16.mxu0 0
        %1377 = vmatmul.mubr.bf16.gmra.mrb[0].mxu0 %v1208
        %v1378 = vpop.f32.mrb[0].mxu0
        %v1379 = vadd.f32 0.0, %v1378
        %v1380 = vpop.f32.mrb[0].mxu0
        %v1381 = vpop.f32.mrb[0].mxu0
        %v1382 = vadd.f32 0.0, %v1381
        %v1383 = vpop.f32.mrb[0].mxu0
        %1384 = vmatprep.mubr.bf16.mxu0 0
        %1385 = vmatmul.mubr.bf16.gmra.mrb[0].mxu0 %v1209
        %v1386 = vpop.f32.mrb[0].mxu0
        %v1387 = vadd.f32 0.0, %v1386
        %v1388 = vpop.f32.mrb[0].mxu0
        %v1389 = vpop.f32.mrb[0].mxu0
        %v1390 = vadd.f32 0.0, %v1389
        %v1391 = vpop.f32.mrb[0].mxu0
        %1392 = vmatprep.mubr.bf16.mxu0 0
        %1393 = vmatmul.mubr.bf16.gmra.mrb[0].mxu0 %v1210
        %v1394 = vpop.f32.mrb[0].mxu0
        %v1395 = vadd.f32 0.0, %v1394
        %v1396 = vpop.f32.mrb[0].mxu0
        %v1397 = vpop.f32.mrb[0].mxu0
        %v1398 = vadd.f32 0.0, %v1397
        %v1399 = vpop.f32.mrb[0].mxu0
        %1400 = vmatprep.mubr.bf16.mxu0 0
        %1401 = vmatmul.mubr.bf16.gmra.mrb[0].mxu0 %v1211
        %v1402 = vpop.f32.mrb[0].mxu0
        %v1403 = vadd.f32 0.0, %v1402
        %v1404 = vpop.f32.mrb[0].mxu0
        %v1405 = vpop.f32.mrb[0].mxu0
        %v1406 = vadd.f32 0.0, %v1405
        %v1407 = vpop.f32.mrb[0].mxu0
        %1408 = vmatprep.mubr.bf16.mxu0 0
        %1409 = vmatmul.mubr.bf16.gmra.mrb[0].mxu0 %v1212
        %v1410 = vpop.f32.mrb[0].mxu0
        %v1411 = vadd.f32 0.0, %v1410
        %v1412 = vpop.f32.mrb[0].mxu0
        %v1413 = vpop.f32.mrb[0].mxu0
        %v1414 = vadd.f32 0.0, %v1413
        %v1415 = vpop.f32.mrb[0].mxu0
        %1416 = vmatprep.mubr.bf16.mxu0 0
        %1417 = vmatmul.mubr.bf16.gmra.mrb[0].mxu0 %v1213
        %v1418 = vpop.f32.mrb[0].mxu0
        %v1419 = vadd.f32 0.0, %v1418
        %v1420 = vpop.f32.mrb[0].mxu0
        %v1421 = vpop.f32.mrb[0].mxu0
        %v1422 = vadd.f32 0.0, %v1421
        %v1423 = vpop.f32.mrb[0].mxu0
        %1424 = vmatprep.mubr.bf16.mxu0 0
        %1425 = vmatmul.mubr.bf16.gmra.mrb[0].mxu0 %v1214
        %v1426 = vpop.f32.mrb[0].mxu0
        %v1427 = vadd.f32 0.0, %v1426
        %v1428 = vpop.f32.mrb[0].mxu0
        %v1429 = vpop.f32.mrb[0].mxu0
        %v1430 = vadd.f32 0.0, %v1429
        %v1431 = vpop.f32.mrb[0].mxu0
        %1432 = vmatprep.mubr.bf16.mxu0 0
        %1433 = vmatmul.mubr.bf16.gmra.mrb[0].mxu0 %v1215
        %v1434 = vpop.f32.mrb[0].mxu0
        %v1435 = vadd.f32 0.0, %v1434
        %v1436 = vpop.f32.mrb[0].mxu0
        %v1437 = vpop.f32.mrb[0].mxu0
        %v1438 = vadd.f32 0.0, %v1437
        %v1439 = vpop.f32.mrb[0].mxu0
        %1440 = vdwg.mxu0
        %v1441 = vadd.f32 %v1168, %v1315
        %v1442 = vadd.f32 %v1169, %v1318
        %v1443 = vadd.f32 %v1170, %v1323
        %v1444 = vadd.f32 %v1171, %v1326
        %v1445 = vadd.f32 %v1172, %v1331
        %v1446 = vadd.f32 %v1173, %v1334
        %v1447 = vadd.f32 %v1174, %v1339
        %v1448 = vadd.f32 %v1175, %v1342
        %v1449 = vadd.f32 %v1176, %v1347
        %v1450 = vadd.f32 %v1177, %v1350
        %v1451 = vadd.f32 %v1178, %v1355
        %v1452 = vadd.f32 %v1179, %v1358
        %v1453 = vadd.f32 %v1180, %v1363
        %v1454 = vadd.f32 %v1181, %v1366
        %v1455 = vadd.f32 %v1182, %v1371
        %v1456 = vadd.f32 %v1183, %v1374
        %v1457 = vadd.f32 %v1184, %v1379
        %v1458 = vadd.f32 %v1185, %v1382
        %v1459 = vadd.f32 %v1186, %v1387
        %v1460 = vadd.f32 %v1187, %v1390
        %v1461 = vadd.f32 %v1188, %v1395
        %v1462 = vadd.f32 %v1189, %v1398
        %v1463 = vadd.f32 %v1190, %v1403
        %v1464 = vadd.f32 %v1191, %v1406
        %v1465 = vadd.f32 %v1192, %v1411
        %v1466 = vadd.f32 %v1193, %v1414
        %v1467 = vadd.f32 %v1194, %v1419
        %v1468 = vadd.f32 %v1195, %v1422
        %v1469 = vadd.f32 %v1196, %v1427
        %v1470 = vadd.f32 %v1197, %v1430
        %v1471 = vadd.f32 %v1198, %v1435
        %v1472 = vadd.f32 %v1199, %v1438
        %1473 = vst [vmem:[#allocation2] sm:$0xff] %v1441
        %1474 = vst [vmem:[#allocation2 + $0x8] sm:$0xff] %v1442
        %1475 = vst [vmem:[#allocation2 + $0x10] sm:$0xff] %v1443
        %1476 = vst [vmem:[#allocation2 + $0x18] sm:$0xff] %v1444
        %1477 = vst [vmem:[#allocation2 + $0x20] sm:$0xff] %v1445
        %1478 = vst [vmem:[#allocation2 + $0x28] sm:$0xff] %v1446
        %1479 = vst [vmem:[#allocation2 + $0x30] sm:$0xff] %v1447
        %1480 = vst [vmem:[#allocation2 + $0x38] sm:$0xff] %v1448
        %1481 = vst [vmem:[#allocation2 + $0x40] sm:$0xff] %v1449
        %1482 = vst [vmem:[#allocation2 + $0x48] sm:$0xff] %v1450
        %1483 = vst [vmem:[#allocation2 + $0x50] sm:$0xff] %v1451
        %1484 = vst [vmem:[#allocation2 + $0x58] sm:$0xff] %v1452
        %1485 = vst [vmem:[#allocation2 + $0x60] sm:$0xff] %v1453
        %1486 = vst [vmem:[#allocation2 + $0x68] sm:$0xff] %v1454
        %1487 = vst [vmem:[#allocation2 + $0x70] sm:$0xff] %v1455
        %1488 = vst [vmem:[#allocation2 + $0x78] sm:$0xff] %v1456
        %1489 = vst [vmem:[#allocation2 + $0x80] sm:$0xff] %v1457
        %1490 = vst [vmem:[#allocation2 + $0x88] sm:$0xff] %v1458
        %1491 = vst [vmem:[#allocation2 + $0x90] sm:$0xff] %v1459
        %1492 = vst [vmem:[#allocation2 + $0x98] sm:$0xff] %v1460
        %1493 = vst [vmem:[#allocation2 + $0xa0] sm:$0xff] %v1461
        %1494 = vst [vmem:[#allocation2 + $0xa8] sm:$0xff] %v1462
        %1495 = vst [vmem:[#allocation2 + $0xb0] sm:$0xff] %v1463
        %1496 = vst [vmem:[#allocation2 + $0xb8] sm:$0xff] %v1464
        %1497 = vst [vmem:[#allocation2 + $0xc0] sm:$0xff] %v1465
        %1498 = vst [vmem:[#allocation2 + $0xc8] sm:$0xff] %v1466
        %1499 = vst [vmem:[#allocation2 + $0xd0] sm:$0xff] %v1467
        %1500 = vst [vmem:[#allocation2 + $0xd8] sm:$0xff] %v1468
        %1501 = vst [vmem:[#allocation2 + $0xe0] sm:$0xff] %v1469
        %1502 = vst [vmem:[#allocation2 + $0xe8] sm:$0xff] %v1470
        %1503 = vst [vmem:[#allocation2 + $0xf0] sm:$0xff] %v1471
        %1504 = vst [vmem:[#allocation2 + $0xf8] sm:$0xff] %v1472
        // Predicated region
        $region57: #{tpu_custom_call.1} parent=35 // pred_check
          %p1505 = pneg %p298
        $region58: #{tpu_custom_call.1} parent=35 // pred_check_branch
          %1507 = sbr.rel (%p1505) target = $region60
        $region59: #{tpu_custom_call.1} parent=35 // pred_region
          %v1508 = vld [vmem:[#allocation2] sm:$0xff]
          %v1509 = vld [vmem:[#allocation2 + $0x8] sm:$0xff]
          %v1510 = vld [vmem:[#allocation2 + $0x10] sm:$0xff]
          %v1511 = vld [vmem:[#allocation2 + $0x18] sm:$0xff]
          %v1512 = vld [vmem:[#allocation2 + $0x20] sm:$0xff]
          %v1513 = vld [vmem:[#allocation2 + $0x28] sm:$0xff]
          %v1514 = vld [vmem:[#allocation2 + $0x30] sm:$0xff]
          %v1515 = vld [vmem:[#allocation2 + $0x38] sm:$0xff]
          %v1516 = vld [vmem:[#allocation2 + $0x40] sm:$0xff]
          %v1517 = vld [vmem:[#allocation2 + $0x48] sm:$0xff]
          %v1518 = vld [vmem:[#allocation2 + $0x50] sm:$0xff]
          %v1519 = vld [vmem:[#allocation2 + $0x58] sm:$0xff]
          %v1520 = vld [vmem:[#allocation2 + $0x60] sm:$0xff]
          %v1521 = vld [vmem:[#allocation2 + $0x68] sm:$0xff]
          %v1522 = vld [vmem:[#allocation2 + $0x70] sm:$0xff]
          %v1523 = vld [vmem:[#allocation2 + $0x78] sm:$0xff]
          %v1524 = vld [vmem:[#allocation2 + $0x80] sm:$0xff]
          %v1525 = vld [vmem:[#allocation2 + $0x88] sm:$0xff]
          %v1526 = vld [vmem:[#allocation2 + $0x90] sm:$0xff]
          %v1527 = vld [vmem:[#allocation2 + $0x98] sm:$0xff]
          %v1528 = vld [vmem:[#allocation2 + $0xa0] sm:$0xff]
          %v1529 = vld [vmem:[#allocation2 + $0xa8] sm:$0xff]
          %v1530 = vld [vmem:[#allocation2 + $0xb0] sm:$0xff]
          %v1531 = vld [vmem:[#allocation2 + $0xb8] sm:$0xff]
          %v1532 = vld [vmem:[#allocation2 + $0xc0] sm:$0xff]
          %v1533 = vld [vmem:[#allocation2 + $0xc8] sm:$0xff]
          %v1534 = vld [vmem:[#allocation2 + $0xd0] sm:$0xff]
          %v1535 = vld [vmem:[#allocation2 + $0xd8] sm:$0xff]
          %v1536 = vld [vmem:[#allocation2 + $0xe0] sm:$0xff]
          %v1537 = vld [vmem:[#allocation2 + $0xe8] sm:$0xff]
          %v1538 = vld [vmem:[#allocation2 + $0xf0] sm:$0xff]
          %v1539 = vld [vmem:[#allocation2 + $0xf8] sm:$0xff]
          %1540 = vst [vmem:[%s293] sm:$0xff] %v1508
          %1541 = vst [vmem:[%s293 + $0x8] sm:$0xff] %v1509
          %1542 = vst [vmem:[%s293 + $0x10] sm:$0xff] %v1510
          %1543 = vst [vmem:[%s293 + $0x18] sm:$0xff] %v1511
          %1544 = vst [vmem:[%s293 + $0x20] sm:$0xff] %v1512
          %1545 = vst [vmem:[%s293 + $0x28] sm:$0xff] %v1513
          %1546 = vst [vmem:[%s293 + $0x30] sm:$0xff] %v1514
          %1547 = vst [vmem:[%s293 + $0x38] sm:$0xff] %v1515
          %1548 = vst [vmem:[%s293 + $0x40] sm:$0xff] %v1516
          %1549 = vst [vmem:[%s293 + $0x48] sm:$0xff] %v1517
          %1550 = vst [vmem:[%s293 + $0x50] sm:$0xff] %v1518
          %1551 = vst [vmem:[%s293 + $0x58] sm:$0xff] %v1519
          %1552 = vst [vmem:[%s293 + $0x60] sm:$0xff] %v1520
          %1553 = vst [vmem:[%s293 + $0x68] sm:$0xff] %v1521
          %1554 = vst [vmem:[%s293 + $0x70] sm:$0xff] %v1522
          %1555 = vst [vmem:[%s293 + $0x78] sm:$0xff] %v1523
          %1556 = vst [vmem:[%s293 + $0x80] sm:$0xff] %v1524
          %1557 = vst [vmem:[%s293 + $0x88] sm:$0xff] %v1525
          %1558 = vst [vmem:[%s293 + $0x90] sm:$0xff] %v1526
          %1559 = vst [vmem:[%s293 + $0x98] sm:$0xff] %v1527
          %1560 = vst [vmem:[%s293 + $0xa0] sm:$0xff] %v1528
          %1561 = vst [vmem:[%s293 + $0xa8] sm:$0xff] %v1529
          %1562 = vst [vmem:[%s293 + $0xb0] sm:$0xff] %v1530
          %1563 = vst [vmem:[%s293 + $0xb8] sm:$0xff] %v1531
          %1564 = vst [vmem:[%s293 + $0xc0] sm:$0xff] %v1532
          %1565 = vst [vmem:[%s293 + $0xc8] sm:$0xff] %v1533
          %1566 = vst [vmem:[%s293 + $0xd0] sm:$0xff] %v1534
          %1567 = vst [vmem:[%s293 + $0xd8] sm:$0xff] %v1535
          %1568 = vst [vmem:[%s293 + $0xe0] sm:$0xff] %v1536
          %1569 = vst [vmem:[%s293 + $0xe8] sm:$0xff] %v1537
          %1570 = vst [vmem:[%s293 + $0xf0] sm:$0xff] %v1538
          %1571 = vst [vmem:[%s293 + $0xf8] sm:$0xff] %v1539
        $region60: #{tpu_custom_call.1} parent=35 // pred_fallthru
          _
        %s1572 = sand.u32 %s147, 1
        %s1573 = scalar_lea.sflag [#allocation5], %s1572
        %s1574 = sand.u32 %s147, 1
        %s1575 = smul.addr %s1574, 256
        %s1576 = scalar_lea.vmem [#allocation11], %s1575
        // Predicated region
        $region61: #{tpu_custom_call.1} parent=35 // pred_check
          %p1577 = pneg %p157
        $region62: #{tpu_custom_call.1} parent=35 // pred_check_branch
          %1579 = sbr.rel (%p1577) target = $region64
        $region63: #{tpu_custom_call.1} parent=35 // pred_region
          %s1580 = smul.u32 32, %s27
          %s1582 = ssub.s32 4096, 4096
          %1583 = vsyncadd %s1573, %s1582
          %s1584 = smul.addr %s1580, 128
          %s1585 = scalar_lea.hbm %s4, %s1584
          %s1586 = sshll.u32 %s1576, 4
          %s1587 = int_to_ptr.vmem [resolvable:$true] %s1586
          %1592 = dma.vmem_to_hbm [thread:$0]  %s1587, 4096, %s1585, %s1573, 128, 128, 8
        $region64: #{tpu_custom_call.1} parent=35 // pred_fallthru
          _
      $region36: #{tpu_custom_call.1} parent=5 // pred_fallthru
        _
      %p1593 = scmp.le.s32.totalorder 2, %s18
      // Predicated region
      $region65: #{tpu_custom_call.1} parent=5 // pred_check
        %p1594 = pneg %p1593
      $region66: #{tpu_custom_call.1} parent=5 // pred_check_branch
        %1596 = sbr.rel (%p1594) target = $region68
      $region67: #{tpu_custom_call.1} parent=5 // pred_region
        %s1597 = ssub.s32 %s18, 2
        // Predicated region
        $region69: #{tpu_custom_call.1} parent=67 // pred_check
          %p1598 = pneg %p163
        $region70: #{tpu_custom_call.1} parent=67 // pred_check_branch
          %1600 = sbr.rel (%p1598) target = $region72
        $region71: #{tpu_custom_call.1} parent=67 // pred_region
          %s1601 = sand.u32 %s148, 1
          %s1602 = scalar_lea.sflag [#allocation5], %s1601
          %s1603 = sand.u32 %s148, 1
          %s1604 = smul.addr %s1603, 256
          %s1605 = scalar_lea.vmem [#allocation11], %s1604
          %1606 = dma.done %s1602, 4096
        $region72: #{tpu_custom_call.1} parent=67 // pred_fallthru
          _
      $region68: #{tpu_custom_call.1} parent=5 // pred_fallthru
        _
    $region6: #{tpu_custom_call.1} parent=1 // loop_footer
      %s22 = sadd.s32 1, %s18
    $region7: #{tpu_custom_call.1} parent=1 // loop_footer_branch
      %17 = sbr.rel target = $region3
    $region8: #{tpu_custom_call.1} parent=1 // loop_exit
      _
    %1607 = vsyncpa [#allocation4], 1
    %s1608 = scalar_lea.sflag [#allocation4], 1
    %1609 = vsyncpa %s1608, 1
    %1610 = vsyncpa [#allocation7], 1
    %1611 = vsyncpa [#allocation10], 1
    %1612 = vsyncpa [#allocation5], 1
    %s1613 = scalar_lea.sflag [#allocation5], 1
    %1614 = vsyncpa %s1613, 1

</llo_original>
